<compile_context>
chip_gen: v5e
topology: v5e:2x2
jax: 0.10.0
libtpu: 0.0.40
codegen_flags: <defaults>
</compile_context>

<pallas_src>
import math
from functools import partial

import jax
import jax.numpy as jnp
from jax.experimental import pallas as pl
from jax.experimental.pallas import tpu as pltpu

EPS = 1e-6  # LayerNorm eps (added to std, matching the PyTorch module)


# ------------------------------ tile selection -------------------------------

def _pick_tm(M, target=256):
    """Row tile for the row-parallel kernels (big tiles; cdiv grid handles tails)."""
    return M if M <= target else target


def _pick_attn_tiles(S):
    tq = min(S, 128)
    tk = 128 if (S % 128 == 0) else S   # kv tile must divide S (no tail masking yet)
    return tq, tk


# ------------------------------- Pallas kernels -------------------------------

def _layernorm_rows(x, a, b):
    # x:(tm,D) f32, a/b:(1,D).  PyTorch x.std(-1) is unbiased (divide by D-1).
    d = x.shape[-1]
    mean = jnp.mean(x, axis=-1, keepdims=True)
    var = jnp.sum((x - mean) ** 2, axis=-1, keepdims=True) / (d - 1)
    return a * (x - mean) / (jnp.sqrt(var) + EPS) + b


def _ln_qkv_kernel(x_ref, a_ref, b_ref, w_ref, bias_ref, o_ref):
    # Fused LN1 + QKV projection.  x:(tm,D) f32, w:(D,3D) bf16 -> qkv:(tm,3D) bf16.
    xn = _layernorm_rows(x_ref[...], a_ref[...], b_ref[...])
    y = jnp.dot(xn.astype(jnp.bfloat16), w_ref[...],
                preferred_element_type=jnp.float32) + bias_ref[...]
    o_ref[...] = y.astype(o_ref.dtype)


def _flash_attn_kernel(q_ref, k_ref, v_ref, m_ref, o_ref,
                       m_sc, l_sc, acc_sc, *, scale):
    # q:(BH,tq,Dk) bf16, k/v:(BH,tk,Dk) bf16, m:(BH,tk) f32 (1=keep, 0=mask).
    kv = pl.program_id(1)

    @pl.when(kv == 0)
    def _():
        m_sc[...] = jnp.full(m_sc.shape, -jnp.inf, m_sc.dtype)
        l_sc[...] = jnp.zeros(l_sc.shape, l_sc.dtype)
        acc_sc[...] = jnp.zeros(acc_sc.shape, acc_sc.dtype)

    s = jnp.einsum("bqd,bkd->bqk", q_ref[...], k_ref[...],
                   preferred_element_type=jnp.float32) * scale
    s = jnp.where(m_ref[...][:, None, :] == 0, -1e9, s)   # masked_fill(mask==0, -1e9)

    m_new = jnp.maximum(m_sc[...], s.max(-1, keepdims=True))
    alpha = jnp.exp(m_sc[...] - m_new)
    p = jnp.exp(s - m_new)
    l_sc[...] = alpha * l_sc[...] + p.sum(-1, keepdims=True)
    acc_sc[...] = alpha * acc_sc[...] + jnp.einsum(
        "bqk,bkd->bqd", p.astype(v_ref.dtype), v_ref[...],
        preferred_element_type=jnp.float32)
    m_sc[...] = m_new

    @pl.when(kv == pl.num_programs(1) - 1)
    def _():
        o_ref[...] = (acc_sc[...] *
                      pl.reciprocal(l_sc[...], approx=True)).astype(o_ref.dtype)


def _proj_residual_kernel(attn_ref, w_ref, b_ref, res_ref, o_ref):
    # Fused output projection + residual:  out = res + attn @ Wo + bo  (f32 epilogue).
    y = jnp.dot(attn_ref[...], w_ref[...], preferred_element_type=jnp.float32)
    o_ref[...] = res_ref[...] + y + b_ref[...]


def _ln_ffn_residual_kernel(x_ref, a_ref, b_ref, w1_ref, b1_ref, w2_ref, b2_ref, o_ref):
    # Fused LN2 -> W1 -> ReLU -> W2 -> +residual.  Hidden (tm,Dff) tile never leaves VMEM.
    x = x_ref[...]
    xn = _layernorm_rows(x, a_ref[...], b_ref[...])
    h = jnp.dot(xn.astype(jnp.bfloat16), w1_ref[...],
                preferred_element_type=jnp.float32) + b1_ref[...]
    h = jnp.maximum(h, 0.0)
    y = jnp.dot(h.astype(jnp.bfloat16), w2_ref[...],
                preferred_element_type=jnp.float32) + b2_ref[...]
    o_ref[...] = x + y


# ------------------------------ Pallas wrappers -------------------------------

_ROW_PARALLEL = pltpu.CompilerParams(dimension_semantics=("parallel",))


def fused_ln_qkv(x2d, a, b, wqkv_bf16, bqkv, tm):
    M, D = x2d.shape
    N = wqkv_bf16.shape[1]
    return pl.pallas_call(
        _ln_qkv_kernel,
        out_shape=jax.ShapeDtypeStruct((M, N), jnp.bfloat16),
        grid=(pl.cdiv(M, tm),),
        in_specs=[
            pl.BlockSpec((tm, D), lambda i: (i, 0)),
            pl.BlockSpec((1, D), lambda i: (0, 0)),
            pl.BlockSpec((1, D), lambda i: (0, 0)),
            pl.BlockSpec((D, N), lambda i: (0, 0)),      # weight stays resident
            pl.BlockSpec((1, N), lambda i: (0, 0)),
        ],
        out_specs=pl.BlockSpec((tm, N), lambda i: (i, 0)),
        compiler_params=_ROW_PARALLEL,
    )(x2d, a.reshape(1, D), b.reshape(1, D), wqkv_bf16, bqkv.reshape(1, N))


def flash_attention(q, k, v, mask_bh):
    # q/k/v: (BH, S, Dk) bf16 ; mask_bh: (BH, S) f32.
    BH, S, Dk = q.shape
    tq, tk = _pick_attn_tiles(S)
    scale = 1.0 / math.sqrt(Dk)
    return pl.pallas_call(
        partial(_flash_attn_kernel, scale=scale),
        out_shape=jax.ShapeDtypeStruct((BH, S, Dk), jnp.bfloat16),
        grid=(pl.cdiv(S, tq), S // tk),
        in_specs=[
            pl.BlockSpec((BH, tq, Dk), lambda qi, ki: (0, qi, 0)),
            pl.BlockSpec((BH, tk, Dk), lambda qi, ki: (0, ki, 0)),
            pl.BlockSpec((BH, tk, Dk), lambda qi, ki: (0, ki, 0)),
            pl.BlockSpec((BH, tk), lambda qi, ki: (0, ki)),
        ],
        out_specs=pl.BlockSpec((BH, tq, Dk), lambda qi, ki: (0, qi, 0)),
        scratch_shapes=[
            pltpu.VMEM((BH, tq, 1), jnp.float32),
            pltpu.VMEM((BH, tq, 1), jnp.float32),
            pltpu.VMEM((BH, tq, Dk), jnp.float32),
        ],
        compiler_params=pltpu.CompilerParams(
            dimension_semantics=("parallel", "arbitrary")),
    )(q, k, v, mask_bh)


def fused_out_proj_residual(attn2d, wo_bf16, bo, resid2d, tm):
    M, D = resid2d.shape
    return pl.pallas_call(
        _proj_residual_kernel,
        out_shape=jax.ShapeDtypeStruct((M, D), jnp.float32),
        grid=(pl.cdiv(M, tm),),
        in_specs=[
            pl.BlockSpec((tm, D), lambda i: (i, 0)),
            pl.BlockSpec((D, D), lambda i: (0, 0)),
            pl.BlockSpec((1, D), lambda i: (0, 0)),
            pl.BlockSpec((tm, D), lambda i: (i, 0)),
        ],
        out_specs=pl.BlockSpec((tm, D), lambda i: (i, 0)),
        compiler_params=_ROW_PARALLEL,
    )(attn2d, wo_bf16, bo.reshape(1, D), resid2d)


def fused_ln_ffn_residual(x2d, a, b, w1_bf16, b1, w2_bf16, b2, tm):
    M, D = x2d.shape
    Dff = w1_bf16.shape[1]
    return pl.pallas_call(
        _ln_ffn_residual_kernel,
        out_shape=jax.ShapeDtypeStruct((M, D), jnp.float32),
        grid=(pl.cdiv(M, tm),),
        in_specs=[
            pl.BlockSpec((tm, D), lambda i: (i, 0)),
            pl.BlockSpec((1, D), lambda i: (0, 0)),
            pl.BlockSpec((1, D), lambda i: (0, 0)),
            pl.BlockSpec((D, Dff), lambda i: (0, 0)),    # W1 resident across row grid
            pl.BlockSpec((1, Dff), lambda i: (0, 0)),
            pl.BlockSpec((Dff, D), lambda i: (0, 0)),    # W2 resident across row grid
            pl.BlockSpec((1, D), lambda i: (0, 0)),
        ],
        out_specs=pl.BlockSpec((tm, D), lambda i: (i, 0)),
        compiler_params=_ROW_PARALLEL,
    )(x2d, a.reshape(1, D), b.reshape(1, D), w1_bf16, b1.reshape(1, Dff),
      w2_bf16, b2.reshape(1, D))


# ----------------------------- EncoderLayer forward ----------------------------

@partial(jax.jit, static_argnames=("num_heads",))
def encoder_layer_forward(x, mask, params, *, num_heads):
    B, S, D = x.shape
    H = num_heads
    Dk = D // H
    M = B * S
    tm = _pick_tm(M)
    x2 = x.reshape(M, D)

    # --- sublayer 1: x + SelfAttn(LN1(x), mask) ---
    qkv = fused_ln_qkv(x2, params["ln1_a"], params["ln1_b"],
                       params["wqkv"], params["bqkv"], tm)          # (M, 3D) bf16
    qkv = qkv.reshape(B, S, 3, H, Dk).transpose(2, 0, 3, 1, 4).reshape(3, B * H, S, Dk)
    q, k, v = qkv[0], qkv[1], qkv[2]
    mask_bh = jnp.broadcast_to(mask.reshape(B, 1, S), (B, H, S)).reshape(B * H, S)
    attn = flash_attention(q, k, v, mask_bh)                         # (BH, S, Dk) bf16
    attn = attn.reshape(B, H, S, Dk).transpose(0, 2, 1, 3).reshape(M, D)
    x2 = fused_out_proj_residual(attn, params["wo"], params["bo"], x2, tm)

    # --- sublayer 2: x + FFN(LN2(x)) ---
    x2 = fused_ln_ffn_residual(x2, params["ln2_a"], params["ln2_b"],
                               params["w1"], params["b1"],
                               params["w2"], params["b2"], tm)
    return x2.reshape(B, S, D)


# ----------------------------- pure-JAX reference ------------------------------

def _ref_layernorm(x, a, b):
    mean = x.mean(-1, keepdims=True)
    std = jnp.sqrt(jnp.sum((x - mean) ** 2, -1, keepdims=True) / (x.shape[-1] - 1))
    return a * (x - mean) / (std + EPS) + b


def _ref_forward(x, mask, p, H):
    B, S, D = x.shape
    Dk = D // H
    xn = _ref_layernorm(x, p["ln1_a"], p["ln1_b"])
    q = (xn @ p["wq"] + p["bq"]).reshape(B, S, H, Dk).transpose(0, 2, 1, 3)
    k = (xn @ p["wk"] + p["bk"]).reshape(B, S, H, Dk).transpose(0, 2, 1, 3)
    v = (xn @ p["wv"] + p["bv"]).reshape(B, S, H, Dk).transpose(0, 2, 1, 3)
    s = jnp.einsum("bhqd,bhkd->bhqk", q, k) / math.sqrt(Dk)
    s = jnp.where(mask[:, None, :, :] == 0, -1e9, s)
    a = jax.nn.softmax(s, axis=-1)
    o = jnp.einsum("bhqk,bhkd->bhqd", a, v).transpose(0, 2, 1, 3).reshape(B, S, D)
    x = x + (o @ p["wo"] + p["bo"])
    xn = _ref_layernorm(x, p["ln2_a"], p["ln2_b"])
    h = jnp.maximum(xn @ p["w1"] + p["b1"], 0.0) @ p["w2"] + p["b2"]
    return x + h


# --------------------------------- init & main ---------------------------------

def init_params_f32(key, D, Dff):
    ks = jax.random.split(key, 6)
    return {
        "wq": 0.02 * jax.random.normal(ks[0], (D, D), jnp.float32),
        "bq": jnp.zeros((D,), jnp.float32),
        "wk": 0.02 * jax.random.normal(ks[1], (D, D), jnp.float32),
        "bk": jnp.zeros((D,), jnp.float32),
        "wv": 0.02 * jax.random.normal(ks[2], (D, D), jnp.float32),
        "bv": jnp.zeros((D,), jnp.float32),
        "wo": 0.02 * jax.random.normal(ks[3], (D, D), jnp.float32),
        "bo": jnp.zeros((D,), jnp.float32),
        "w1": 0.02 * jax.random.normal(ks[4], (D, Dff), jnp.float32),
        "b1": jnp.zeros((Dff,), jnp.float32),
        "w2": 0.02 * jax.random.normal(ks[5], (Dff, D), jnp.float32),
        "b2": jnp.zeros((D,), jnp.float32),
        "ln1_a": jnp.ones((D,), jnp.float32),
        "ln1_b": jnp.zeros((D,), jnp.float32),
        "ln2_a": jnp.ones((D,), jnp.float32),
        "ln2_b": jnp.zeros((D,), jnp.float32),
    }


def pack_params(p):
    """Kernel-side params: bf16 MXU weights, QKV concatenated into one (D,3D) weight."""
    return {
        "wqkv": jnp.concatenate([p["wq"], p["wk"], p["wv"]], axis=1).astype(jnp.bfloat16),
        "bqkv": jnp.concatenate([p["bq"], p["bk"], p["bv"]]),
        "wo": p["wo"].astype(jnp.bfloat16), "bo": p["bo"],
        "w1": p["w1"].astype(jnp.bfloat16), "b1": p["b1"],
        "w2": p["w2"].astype(jnp.bfloat16), "b2": p["b2"],
        "ln1_a": p["ln1_a"], "ln1_b": p["ln1_b"],
        "ln2_a": p["ln2_a"], "ln2_b": p["ln2_b"],
    }


if __name__ == "__main__":
    B, S, D, H, Dff = 2, 8, 32, 4, 64
    key = jax.random.PRNGKey(0)
    kx, kp = jax.random.split(key)
    x = jax.random.normal(kx, (B, S, D), jnp.float32)
    # mask [B,1,S]: first batch keeps all positions, second masks the last 2.
    lengths = jnp.array([S, S - 2])
    mask = (jnp.arange(S)[None, :] < lengths[:, None]).astype(jnp.float32)[:, None, :]

    params_f32 = init_params_f32(kp, D, Dff)
    params = pack_params(params_f32)

    out = encoder_layer_forward(x, mask, params, num_heads=H)
    out = jax.block_until_ready(out)

    ref = _ref_forward(x, mask, params_f32, H)
    assert out.shape == (B, S, D)
    max_err = float(jnp.max(jnp.abs(out - ref)))
    # bf16 MXU inputs vs a pure-f32 reference -> looser tolerance.
    assert jnp.allclose(out, ref, atol=2e-2, rtol=2e-2), f"mismatch vs reference (max abs err {max_err})"

    print("KERNEL_OK")
</pallas_src>

<mosaic_0001>
module attributes {stable_mosaic.version = 11 : i64} {
  func.func @_ln_qkv_kernel(%arg0: i32, %arg1: memref<16x32xf32, #tpu.memory_space<vmem>>, %arg2: memref<1x32xf32, #tpu.memory_space<vmem>>, %arg3: memref<1x32xf32, #tpu.memory_space<vmem>>, %arg4: memref<32x96xbf16, #tpu.memory_space<vmem>>, %arg5: memref<1x96xf32, #tpu.memory_space<vmem>>, %arg6: memref<16x96xbf16, #tpu.memory_space<vmem>>) attributes {dimension_semantics = [#tpu.dimension_semantics<parallel>], iteration_bounds = array<i64: 1>, scalar_prefetch = 0 : i64, scratch_operands = 0 : i64, tpu.core_type = #tpu.core_type<tc>, window_params = [{transform_indices = @transform_0, window_bounds = array<i64: 16, 32>}, {pipeline_mode = #tpu.pipeline_mode<synchronous>, transform_indices = @transform_1, window_bounds = array<i64: 1, 32>}, {pipeline_mode = #tpu.pipeline_mode<synchronous>, transform_indices = @transform_2, window_bounds = array<i64: 1, 32>}, {pipeline_mode = #tpu.pipeline_mode<synchronous>, transform_indices = @transform_3, window_bounds = array<i64: 32, 96>}, {pipeline_mode = #tpu.pipeline_mode<synchronous>, transform_indices = @transform_4, window_bounds = array<i64: 1, 96>}, {transform_indices = @transform_5, window_bounds = array<i64: 16, 96>}]} {
    %c0 = arith.constant 0 : index
    %c0_0 = arith.constant 0 : index
    %0 = vector.load %arg1[%c0, %c0_0] : memref<16x32xf32, #tpu.memory_space<vmem>>, vector<16x32xf32>
    %c0_1 = arith.constant 0 : index
    %c0_2 = arith.constant 0 : index
    %1 = vector.load %arg2[%c0_1, %c0_2] : memref<1x32xf32, #tpu.memory_space<vmem>>, vector<1x32xf32>
    %c0_3 = arith.constant 0 : index
    %c0_4 = arith.constant 0 : index
    %2 = vector.load %arg3[%c0_3, %c0_4] : memref<1x32xf32, #tpu.memory_space<vmem>>, vector<1x32xf32>
    %cst = arith.constant dense<0.000000e+00> : vector<16xf32>
    %3 = vector.multi_reduction <add>, %0, %cst [1] : vector<16x32xf32> to vector<16xf32>
    %4 = vector.shape_cast %3 : vector<16xf32> to vector<16x1xf32>
    %cst_5 = arith.constant 3.200000e+01 : f32
    %5 = vector.broadcast %cst_5 : f32 to vector<16x1xf32>
    %6 = arith.divf %4, %5 : vector<16x1xf32>
    %7 = vector.broadcast %6 : vector<16x1xf32> to vector<16x32xf32>
    %8 = arith.subf %0, %7 : vector<16x32xf32>
    %9 = arith.mulf %8, %8 : vector<16x32xf32>
    %cst_6 = arith.constant dense<0.000000e+00> : vector<16xf32>
    %10 = vector.multi_reduction <add>, %9, %cst_6 [1] : vector<16x32xf32> to vector<16xf32>
    %11 = vector.shape_cast %10 : vector<16xf32> to vector<16x1xf32>
    %cst_7 = arith.constant 3.100000e+01 : f32
    %12 = vector.broadcast %cst_7 : f32 to vector<16x1xf32>
    %13 = arith.divf %11, %12 : vector<16x1xf32>
    %14 = vector.broadcast %6 : vector<16x1xf32> to vector<16x32xf32>
    %15 = arith.subf %0, %14 : vector<16x32xf32>
    %16 = vector.broadcast %1 : vector<1x32xf32> to vector<16x32xf32>
    %17 = arith.mulf %16, %15 : vector<16x32xf32>
    %18 = math.sqrt %13 : vector<16x1xf32>
    %cst_8 = arith.constant 9.99999997E-7 : f32
    %19 = vector.broadcast %cst_8 : f32 to vector<16x1xf32>
    %20 = arith.addf %18, %19 : vector<16x1xf32>
    %21 = vector.broadcast %20 : vector<16x1xf32> to vector<16x32xf32>
    %22 = arith.divf %17, %21 : vector<16x32xf32>
    %23 = vector.broadcast %2 : vector<1x32xf32> to vector<16x32xf32>
    %24 = arith.addf %22, %23 : vector<16x32xf32>
    %25 = arith.truncf %24 : vector<16x32xf32> to vector<16x32xbf16>
    %c0_9 = arith.constant 0 : index
    %c0_10 = arith.constant 0 : index
    %26 = vector.load %arg4[%c0_9, %c0_10] : memref<32x96xbf16, #tpu.memory_space<vmem>>, vector<32x96xbf16>
    %cst_11 = arith.constant dense<0.000000e+00> : vector<16x96xf32>
    %27 = tpu.matmul %25, %26, %cst_11 {dimension_numbers = #tpu.dot_dimension_numbers<[1], [0], [0], [1], [0, 0, 1, 1], [], []>} : vector<16x32xbf16>, vector<32x96xbf16>, vector<16x96xf32> -> vector<16x96xf32>
    %c0_12 = arith.constant 0 : index
    %c0_13 = arith.constant 0 : index
    %28 = vector.load %arg5[%c0_12, %c0_13] : memref<1x96xf32, #tpu.memory_space<vmem>>, vector<1x96xf32>
    %29 = vector.broadcast %28 : vector<1x96xf32> to vector<16x96xf32>
    %30 = arith.addf %27, %29 : vector<16x96xf32>
    %31 = arith.truncf %30 : vector<16x96xf32> to vector<16x96xbf16>
    %c0_14 = arith.constant 0 : index
    %c0_15 = arith.constant 0 : index
    %32 = vector.load %arg6[%c0_14, %c0_15] : memref<16x96xbf16, #tpu.memory_space<vmem>>, vector<16x96xbf16>
    tpu.vector_store %arg6[%c0_14, %c0_15], %31 {strides = array<i32>} : memref<16x96xbf16, #tpu.memory_space<vmem>>, vector<16x96xbf16>,
    return
  }
  func.func @transform_0(%arg0: i32) -> (i32, i32) {
    %c0_i32 = arith.constant 0 : i32
    %c0_i32_0 = arith.constant 0 : i32
    return %arg0, %c0_i32 : i32, i32
  }
  func.func @transform_1(%arg0: i32) -> (i32, i32) {
    %c0_i32 = arith.constant 0 : i32
    %c0_i32_0 = arith.constant 0 : i32
    %c0_i32_1 = arith.constant 0 : i32
    return %c0_i32, %c0_i32_0 : i32, i32
  }
  func.func @transform_2(%arg0: i32) -> (i32, i32) {
    %c0_i32 = arith.constant 0 : i32
    %c0_i32_0 = arith.constant 0 : i32
    %c0_i32_1 = arith.constant 0 : i32
    return %c0_i32, %c0_i32_0 : i32, i32
  }
  func.func @transform_3(%arg0: i32) -> (i32, i32) {
    %c0_i32 = arith.constant 0 : i32
    %c0_i32_0 = arith.constant 0 : i32
    %c0_i32_1 = arith.constant 0 : i32
    return %c0_i32, %c0_i32_0 : i32, i32
  }
  func.func @transform_4(%arg0: i32) -> (i32, i32) {
    %c0_i32 = arith.constant 0 : i32
    %c0_i32_0 = arith.constant 0 : i32
    %c0_i32_1 = arith.constant 0 : i32
    return %c0_i32, %c0_i32_0 : i32, i32
  }
  func.func @transform_5(%arg0: i32) -> (i32, i32) {
    %c0_i32 = arith.constant 0 : i32
    %c0_i32_0 = arith.constant 0 : i32
    return %arg0, %c0_i32 : i32, i32
  }
}

module attributes {stable_mosaic.version = 11 : i64} {
  func.func @_flash_attn_kernel(%arg0: i32, %arg1: i32, %arg2: memref<8x8x8xbf16, #tpu.memory_space<vmem>>, %arg3: memref<8x8x8xbf16, #tpu.memory_space<vmem>>, %arg4: memref<8x8x8xbf16, #tpu.memory_space<vmem>>, %arg5: memref<8x8xf32, #tpu.memory_space<vmem>>, %arg6: memref<8x8x8xbf16, #tpu.memory_space<vmem>>, %arg7: memref<8x8x1xf32, #tpu.memory_space<vmem>>, %arg8: memref<8x8x1xf32, #tpu.memory_space<vmem>>, %arg9: memref<8x8x8xf32, #tpu.memory_space<vmem>>) attributes {dimension_semantics = [#tpu.dimension_semantics<parallel>, #tpu.dimension_semantics<arbitrary>], iteration_bounds = array<i64: 1, 1>, scalar_prefetch = 0 : i64, scratch_operands = 3 : i64, tpu.core_type = #tpu.core_type<tc>, window_params = [{transform_indices = @transform_0, window_bounds = array<i64: 8, 8, 8>}, {transform_indices = @transform_1, window_bounds = array<i64: 8, 8, 8>}, {transform_indices = @transform_2, window_bounds = array<i64: 8, 8, 8>}, {transform_indices = @transform_3, window_bounds = array<i64: 8, 8>}, {transform_indices = @transform_4, window_bounds = array<i64: 8, 8, 8>}]} {
    %c0_i32 = arith.constant 0 : i32
    %0 = arith.cmpi eq, %arg1, %c0_i32 : i32
    %1 = arith.extui %0 : i1 to i32
    %c0_i32_0 = arith.constant 0 : i32
    %2 = arith.cmpi ne, %1, %c0_i32_0 : i32
    scf.if %2 {
      %cst_40 = arith.constant 0xFF800000 : f32
      %44 = vector.broadcast %cst_40 : f32 to vector<8x8x1xf32>
      %c0_41 = arith.constant 0 : index
      %c0_42 = arith.constant 0 : index
      %c0_43 = arith.constant 0 : index
      %45 = vector.load %arg7[%c0_41, %c0_42, %c0_43] : memref<8x8x1xf32, #tpu.memory_space<vmem>>, vector<8x8x1xf32>
      tpu.vector_store %arg7[%c0_41, %c0_42, %c0_43], %44 {strides = array<i32>} : memref<8x8x1xf32, #tpu.memory_space<vmem>>, vector<8x8x1xf32>,
      %cst_44 = arith.constant 0.000000e+00 : f32
      %46 = vector.broadcast %cst_44 : f32 to vector<8x8x1xf32>
      %c0_45 = arith.constant 0 : index
      %c0_46 = arith.constant 0 : index
      %c0_47 = arith.constant 0 : index
      %47 = vector.load %arg8[%c0_45, %c0_46, %c0_47] : memref<8x8x1xf32, #tpu.memory_space<vmem>>, vector<8x8x1xf32>
      tpu.vector_store %arg8[%c0_45, %c0_46, %c0_47], %46 {strides = array<i32>} : memref<8x8x1xf32, #tpu.memory_space<vmem>>, vector<8x8x1xf32>,
      %cst_48 = arith.constant 0.000000e+00 : f32
      %48 = vector.broadcast %cst_48 : f32 to vector<8x8x8xf32>
      %c0_49 = arith.constant 0 : index
      %c0_50 = arith.constant 0 : index
      %c0_51 = arith.constant 0 : index
      %49 = vector.load %arg9[%c0_49, %c0_50, %c0_51] : memref<8x8x8xf32, #tpu.memory_space<vmem>>, vector<8x8x8xf32>
      tpu.vector_store %arg9[%c0_49, %c0_50, %c0_51], %48 {strides = array<i32>} : memref<8x8x8xf32, #tpu.memory_space<vmem>>, vector<8x8x8xf32>,
    } else {
    }
    %c0 = arith.constant 0 : index
    %c0_1 = arith.constant 0 : index
    %c0_2 = arith.constant 0 : index
    %3 = vector.load %arg2[%c0, %c0_1, %c0_2] : memref<8x8x8xbf16, #tpu.memory_space<vmem>>, vector<8x8x8xbf16>
    %c0_3 = arith.constant 0 : index
    %c0_4 = arith.constant 0 : index
    %c0_5 = arith.constant 0 : index
    %4 = vector.load %arg3[%c0_3, %c0_4, %c0_5] : memref<8x8x8xbf16, #tpu.memory_space<vmem>>, vector<8x8x8xbf16>
    "tpu.trace_start"() <{level = 10 : i32, message = "bqd,bkd->bqk"}> : () -> ()
    %cst = arith.constant dense<0.000000e+00> : vector<8x8x8xf32>
    %5 = tpu.matmul %3, %4, %cst {dimension_numbers = #tpu.dot_dimension_numbers<[2], [2], [1], [1], [0, 0, 0, 1, 1, 1], [0], [0]>} : vector<8x8x8xbf16>, vector<8x8x8xbf16>, vector<8x8x8xf32> -> vector<8x8x8xf32>
    "tpu.trace_stop"() : () -> ()
    %cst_6 = arith.constant 0.353553385 : f32
    %6 = vector.broadcast %cst_6 : f32 to vector<8x8x8xf32>
    %7 = arith.mulf %5, %6 : vector<8x8x8xf32>
    %c0_7 = arith.constant 0 : index
    %c0_8 = arith.constant 0 : index
    %8 = vector.load %arg5[%c0_7, %c0_8] : memref<8x8xf32, #tpu.memory_space<vmem>>, vector<8x8xf32>
    %9 = vector.shape_cast %8 : vector<8x8xf32> to vector<8x1x8xf32>
    %cst_9 = arith.constant 0.000000e+00 : f32
    %10 = vector.broadcast %cst_9 : f32 to vector<8x1x8xf32>
    %11 = arith.cmpf oeq, %9, %10 : vector<8x1x8xf32>
    %cst_10 = arith.constant -1.000000e+09 : f32
    %12 = vector.shape_cast %11 : vector<8x1x8xi1> to vector<8x1x8xi1>
    %13 = vector.broadcast %12 : vector<8x1x8xi1> to vector<8x8x8xi1>
    %14 = vector.broadcast %cst_10 : f32 to vector<8x8x8xf32>
    %15 = arith.select %13, %14, %7 : vector<8x8x8xi1>, vector<8x8x8xf32>
    %c0_11 = arith.constant 0 : index
    %c0_12 = arith.constant 0 : index
    %c0_13 = arith.constant 0 : index
    %16 = vector.load %arg7[%c0_11, %c0_12, %c0_13] : memref<8x8x1xf32, #tpu.memory_space<vmem>>, vector<8x8x1xf32>
    %cst_14 = arith.constant dense<0xFF800000> : vector<8x8xf32>
    %17 = vector.multi_reduction <maximumf>, %15, %cst_14 [2] : vector<8x8x8xf32> to vector<8x8xf32>
    %18 = vector.shape_cast %17 : vector<8x8xf32> to vector<8x8x1xf32>
    %19 = arith.maximumf %16, %18 : vector<8x8x1xf32>
    %c0_15 = arith.constant 0 : index
    %c0_16 = arith.constant 0 : index
    %c0_17 = arith.constant 0 : index
    %20 = vector.load %arg7[%c0_15, %c0_16, %c0_17] : memref<8x8x1xf32, #tpu.memory_space<vmem>>, vector<8x8x1xf32>
    %21 = arith.subf %20, %19 : vector<8x8x1xf32>
    %22 = math.exp %21 : vector<8x8x1xf32>
    %23 = vector.broadcast %19 : vector<8x8x1xf32> to vector<8x8x8xf32>
    %24 = arith.subf %15, %23 : vector<8x8x8xf32>
    %25 = math.exp %24 : vector<8x8x8xf32>
    %c0_18 = arith.constant 0 : index
    %c0_19 = arith.constant 0 : index
    %c0_20 = arith.constant 0 : index
    %26 = vector.load %arg8[%c0_18, %c0_19, %c0_20] : memref<8x8x1xf32, #tpu.memory_space<vmem>>, vector<8x8x1xf32>
    %27 = arith.mulf %22, %26 : vector<8x8x1xf32>
    %cst_21 = arith.constant dense<0.000000e+00> : vector<8x8xf32>
    %28 = vector.multi_reduction <add>, %25, %cst_21 [2] : vector<8x8x8xf32> to vector<8x8xf32>
    %29 = vector.shape_cast %28 : vector<8x8xf32> to vector<8x8x1xf32>
    %30 = arith.addf %27, %29 : vector<8x8x1xf32>
    %c0_22 = arith.constant 0 : index
    %c0_23 = arith.constant 0 : index
    %c0_24 = arith.constant 0 : index
    %31 = vector.load %arg8[%c0_22, %c0_23, %c0_24] : memref<8x8x1xf32, #tpu.memory_space<vmem>>, vector<8x8x1xf32>
    tpu.vector_store %arg8[%c0_22, %c0_23, %c0_24], %30 {strides = array<i32>} : memref<8x8x1xf32, #tpu.memory_space<vmem>>, vector<8x8x1xf32>,
    %c0_25 = arith.constant 0 : index
    %c0_26 = arith.constant 0 : index
    %c0_27 = arith.constant 0 : index
    %32 = vector.load %arg9[%c0_25, %c0_26, %c0_27] : memref<8x8x8xf32, #tpu.memory_space<vmem>>, vector<8x8x8xf32>
    %33 = vector.broadcast %22 : vector<8x8x1xf32> to vector<8x8x8xf32>
    %34 = arith.mulf %33, %32 : vector<8x8x8xf32>
    %35 = arith.truncf %25 : vector<8x8x8xf32> to vector<8x8x8xbf16>
    %c0_28 = arith.constant 0 : index
    %c0_29 = arith.constant 0 : index
    %c0_30 = arith.constant 0 : index
    %36 = vector.load %arg4[%c0_28, %c0_29, %c0_30] : memref<8x8x8xbf16, #tpu.memory_space<vmem>>, vector<8x8x8xbf16>
    "tpu.trace_start"() <{level = 10 : i32, message = "bqk,bkd->bqd"}> : () -> ()
    %cst_31 = arith.constant dense<0.000000e+00> : vector<8x8x8xf32>
    %37 = tpu.matmul %35, %36, %cst_31 {dimension_numbers = #tpu.dot_dimension_numbers<[2], [1], [1], [2], [0, 0, 0, 1, 1, 2], [0], [0]>} : vector<8x8x8xbf16>, vector<8x8x8xbf16>, vector<8x8x8xf32> -> vector<8x8x8xf32>
    "tpu.trace_stop"() : () -> ()
    %38 = arith.addf %34, %37 : vector<8x8x8xf32>
    %c0_32 = arith.constant 0 : index
    %c0_33 = arith.constant 0 : index
    %c0_34 = arith.constant 0 : index
    %39 = vector.load %arg9[%c0_32, %c0_33, %c0_34] : memref<8x8x8xf32, #tpu.memory_space<vmem>>, vector<8x8x8xf32>
    tpu.vector_store %arg9[%c0_32, %c0_33, %c0_34], %38 {strides = array<i32>} : memref<8x8x8xf32, #tpu.memory_space<vmem>>, vector<8x8x8xf32>,
    %c0_35 = arith.constant 0 : index
    %c0_36 = arith.constant 0 : index
    %c0_37 = arith.constant 0 : index
    %40 = vector.load %arg7[%c0_35, %c0_36, %c0_37] : memref<8x8x1xf32, #tpu.memory_space<vmem>>, vector<8x8x1xf32>
    tpu.vector_store %arg7[%c0_35, %c0_36, %c0_37], %19 {strides = array<i32>} : memref<8x8x1xf32, #tpu.memory_space<vmem>>, vector<8x8x1xf32>,
    %c0_i32_38 = arith.constant 0 : i32
    %41 = arith.cmpi eq, %arg1, %c0_i32_38 : i32
    %42 = arith.extui %41 : i1 to i32
    %c0_i32_39 = arith.constant 0 : i32
    %43 = arith.cmpi ne, %42, %c0_i32_39 : i32
    scf.if %43 {
      %c0_40 = arith.constant 0 : index
      %c0_41 = arith.constant 0 : index
      %c0_42 = arith.constant 0 : index
      %44 = vector.load %arg9[%c0_40, %c0_41, %c0_42] : memref<8x8x8xf32, #tpu.memory_space<vmem>>, vector<8x8x8xf32>
      %c0_43 = arith.constant 0 : index
      %c0_44 = arith.constant 0 : index
      %c0_45 = arith.constant 0 : index
      %45 = vector.load %arg8[%c0_43, %c0_44, %c0_45] : memref<8x8x1xf32, #tpu.memory_space<vmem>>, vector<8x8x1xf32>
      %46 = tpu.reciprocal %45 {approx = true} : vector<8x8x1xf32> -> vector<8x8x1xf32>
      %47 = vector.broadcast %46 : vector<8x8x1xf32> to vector<8x8x8xf32>
      %48 = arith.mulf %44, %47 : vector<8x8x8xf32>
      %49 = arith.truncf %48 : vector<8x8x8xf32> to vector<8x8x8xbf16>
      %c0_46 = arith.constant 0 : index
      %c0_47 = arith.constant 0 : index
      %c0_48 = arith.constant 0 : index
      %50 = vector.load %arg6[%c0_46, %c0_47, %c0_48] : memref<8x8x8xbf16, #tpu.memory_space<vmem>>, vector<8x8x8xbf16>
      tpu.vector_store %arg6[%c0_46, %c0_47, %c0_48], %49 {strides = array<i32>} : memref<8x8x8xbf16, #tpu.memory_space<vmem>>, vector<8x8x8xbf16>,
    } else {
    }
    return
  }
  func.func @transform_0(%arg0: i32, %arg1: i32) -> (i32, i32, i32) {
    %c0_i32 = arith.constant 0 : i32
    %c0_i32_0 = arith.constant 0 : i32
    %c0_i32_1 = arith.constant 0 : i32
    return %c0_i32, %arg0, %c0_i32_0 : i32, i32, i32
  }
  func.func @transform_1(%arg0: i32, %arg1: i32) -> (i32, i32, i32) {
    %c0_i32 = arith.constant 0 : i32
    %c0_i32_0 = arith.constant 0 : i32
    %c0_i32_1 = arith.constant 0 : i32
    return %c0_i32, %arg1, %c0_i32_0 : i32, i32, i32
  }
  func.func @transform_2(%arg0: i32, %arg1: i32) -> (i32, i32, i32) {
    %c0_i32 = arith.constant 0 : i32
    %c0_i32_0 = arith.constant 0 : i32
    %c0_i32_1 = arith.constant 0 : i32
    return %c0_i32, %arg1, %c0_i32_0 : i32, i32, i32
  }
  func.func @transform_3(%arg0: i32, %arg1: i32) -> (i32, i32) {
    %c0_i32 = arith.constant 0 : i32
    %c0_i32_0 = arith.constant 0 : i32
    return %c0_i32, %arg1 : i32, i32
  }
  func.func @transform_4(%arg0: i32, %arg1: i32) -> (i32, i32, i32) {
    %c0_i32 = arith.constant 0 : i32
    %c0_i32_0 = arith.constant 0 : i32
    %c0_i32_1 = arith.constant 0 : i32
    return %c0_i32, %arg0, %c0_i32_0 : i32, i32, i32
  }
}

module attributes {stable_mosaic.version = 11 : i64} {
  func.func @_proj_residual_kernel(%arg0: i32, %arg1: memref<16x32xbf16, #tpu.memory_space<vmem>>, %arg2: memref<32x32xbf16, #tpu.memory_space<vmem>>, %arg3: memref<1x32xf32, #tpu.memory_space<vmem>>, %arg4: memref<16x32xf32, #tpu.memory_space<vmem>>, %arg5: memref<16x32xf32, #tpu.memory_space<vmem>>) attributes {dimension_semantics = [#tpu.dimension_semantics<parallel>], iteration_bounds = array<i64: 1>, scalar_prefetch = 0 : i64, scratch_operands = 0 : i64, tpu.core_type = #tpu.core_type<tc>, window_params = [{transform_indices = @transform_0, window_bounds = array<i64: 16, 32>}, {pipeline_mode = #tpu.pipeline_mode<synchronous>, transform_indices = @transform_1, window_bounds = array<i64: 32, 32>}, {pipeline_mode = #tpu.pipeline_mode<synchronous>, transform_indices = @transform_2, window_bounds = array<i64: 1, 32>}, {transform_indices = @transform_3, window_bounds = array<i64: 16, 32>}, {transform_indices = @transform_4, window_bounds = array<i64: 16, 32>}]} {
    %c0 = arith.constant 0 : index
    %c0_0 = arith.constant 0 : index
    %0 = vector.load %arg1[%c0, %c0_0] : memref<16x32xbf16, #tpu.memory_space<vmem>>, vector<16x32xbf16>
    %c0_1 = arith.constant 0 : index
    %c0_2 = arith.constant 0 : index
    %1 = vector.load %arg2[%c0_1, %c0_2] : memref<32x32xbf16, #tpu.memory_space<vmem>>, vector<32x32xbf16>
    %cst = arith.constant dense<0.000000e+00> : vector<16x32xf32>
    %2 = tpu.matmul %0, %1, %cst {dimension_numbers = #tpu.dot_dimension_numbers<[1], [0], [0], [1], [0, 0, 1, 1], [], []>} : vector<16x32xbf16>, vector<32x32xbf16>, vector<16x32xf32> -> vector<16x32xf32>
    %c0_3 = arith.constant 0 : index
    %c0_4 = arith.constant 0 : index
    %3 = vector.load %arg4[%c0_3, %c0_4] : memref<16x32xf32, #tpu.memory_space<vmem>>, vector<16x32xf32>
    %4 = arith.addf %3, %2 : vector<16x32xf32>
    %c0_5 = arith.constant 0 : index
    %c0_6 = arith.constant 0 : index
    %5 = vector.load %arg3[%c0_5, %c0_6] : memref<1x32xf32, #tpu.memory_space<vmem>>, vector<1x32xf32>
    %6 = vector.broadcast %5 : vector<1x32xf32> to vector<16x32xf32>
    %7 = arith.addf %4, %6 : vector<16x32xf32>
    %c0_7 = arith.constant 0 : index
    %c0_8 = arith.constant 0 : index
    %8 = vector.load %arg5[%c0_7, %c0_8] : memref<16x32xf32, #tpu.memory_space<vmem>>, vector<16x32xf32>
    tpu.vector_store %arg5[%c0_7, %c0_8], %7 {strides = array<i32>} : memref<16x32xf32, #tpu.memory_space<vmem>>, vector<16x32xf32>,
    return
  }
  func.func @transform_0(%arg0: i32) -> (i32, i32) {
    %c0_i32 = arith.constant 0 : i32
    %c0_i32_0 = arith.constant 0 : i32
    return %arg0, %c0_i32 : i32, i32
  }
  func.func @transform_1(%arg0: i32) -> (i32, i32) {
    %c0_i32 = arith.constant 0 : i32
    %c0_i32_0 = arith.constant 0 : i32
    %c0_i32_1 = arith.constant 0 : i32
    return %c0_i32, %c0_i32_0 : i32, i32
  }
  func.func @transform_2(%arg0: i32) -> (i32, i32) {
    %c0_i32 = arith.constant 0 : i32
    %c0_i32_0 = arith.constant 0 : i32
    %c0_i32_1 = arith.constant 0 : i32
    return %c0_i32, %c0_i32_0 : i32, i32
  }
  func.func @transform_3(%arg0: i32) -> (i32, i32) {
    %c0_i32 = arith.constant 0 : i32
    %c0_i32_0 = arith.constant 0 : i32
    return %arg0, %c0_i32 : i32, i32
  }
  func.func @transform_4(%arg0: i32) -> (i32, i32) {
    %c0_i32 = arith.constant 0 : i32
    %c0_i32_0 = arith.constant 0 : i32
    return %arg0, %c0_i32 : i32, i32
  }
}

module attributes {stable_mosaic.version = 11 : i64} {
  func.func @_ln_ffn_residual_kernel(%arg0: i32, %arg1: memref<16x32xf32, #tpu.memory_space<vmem>>, %arg2: memref<1x32xf32, #tpu.memory_space<vmem>>, %arg3: memref<1x32xf32, #tpu.memory_space<vmem>>, %arg4: memref<32x64xbf16, #tpu.memory_space<vmem>>, %arg5: memref<1x64xf32, #tpu.memory_space<vmem>>, %arg6: memref<64x32xbf16, #tpu.memory_space<vmem>>, %arg7: memref<1x32xf32, #tpu.memory_space<vmem>>, %arg8: memref<16x32xf32, #tpu.memory_space<vmem>>) attributes {dimension_semantics = [#tpu.dimension_semantics<parallel>], iteration_bounds = array<i64: 1>, scalar_prefetch = 0 : i64, scratch_operands = 0 : i64, tpu.core_type = #tpu.core_type<tc>, window_params = [{transform_indices = @transform_0, window_bounds = array<i64: 16, 32>}, {pipeline_mode = #tpu.pipeline_mode<synchronous>, transform_indices = @transform_1, window_bounds = array<i64: 1, 32>}, {pipeline_mode = #tpu.pipeline_mode<synchronous>, transform_indices = @transform_2, window_bounds = array<i64: 1, 32>}, {pipeline_mode = #tpu.pipeline_mode<synchronous>, transform_indices = @transform_3, window_bounds = array<i64: 32, 64>}, {pipeline_mode = #tpu.pipeline_mode<synchronous>, transform_indices = @transform_4, window_bounds = array<i64: 1, 64>}, {pipeline_mode = #tpu.pipeline_mode<synchronous>, transform_indices = @transform_5, window_bounds = array<i64: 64, 32>}, {pipeline_mode = #tpu.pipeline_mode<synchronous>, transform_indices = @transform_6, window_bounds = array<i64: 1, 32>}, {transform_indices = @transform_7, window_bounds = array<i64: 16, 32>}]} {
    %c0 = arith.constant 0 : index
    %c0_0 = arith.constant 0 : index
    %0 = vector.load %arg1[%c0, %c0_0] : memref<16x32xf32, #tpu.memory_space<vmem>>, vector<16x32xf32>
    %c0_1 = arith.constant 0 : index
    %c0_2 = arith.constant 0 : index
    %1 = vector.load %arg2[%c0_1, %c0_2] : memref<1x32xf32, #tpu.memory_space<vmem>>, vector<1x32xf32>
    %c0_3 = arith.constant 0 : index
    %c0_4 = arith.constant 0 : index
    %2 = vector.load %arg3[%c0_3, %c0_4] : memref<1x32xf32, #tpu.memory_space<vmem>>, vector<1x32xf32>
    %cst = arith.constant dense<0.000000e+00> : vector<16xf32>
    %3 = vector.multi_reduction <add>, %0, %cst [1] : vector<16x32xf32> to vector<16xf32>
    %4 = vector.shape_cast %3 : vector<16xf32> to vector<16x1xf32>
    %cst_5 = arith.constant 3.200000e+01 : f32
    %5 = vector.broadcast %cst_5 : f32 to vector<16x1xf32>
    %6 = arith.divf %4, %5 : vector<16x1xf32>
    %7 = vector.broadcast %6 : vector<16x1xf32> to vector<16x32xf32>
    %8 = arith.subf %0, %7 : vector<16x32xf32>
    %9 = arith.mulf %8, %8 : vector<16x32xf32>
    %cst_6 = arith.constant dense<0.000000e+00> : vector<16xf32>
    %10 = vector.multi_reduction <add>, %9, %cst_6 [1] : vector<16x32xf32> to vector<16xf32>
    %11 = vector.shape_cast %10 : vector<16xf32> to vector<16x1xf32>
    %cst_7 = arith.constant 3.100000e+01 : f32
    %12 = vector.broadcast %cst_7 : f32 to vector<16x1xf32>
    %13 = arith.divf %11, %12 : vector<16x1xf32>
    %14 = vector.broadcast %6 : vector<16x1xf32> to vector<16x32xf32>
    %15 = arith.subf %0, %14 : vector<16x32xf32>
    %16 = vector.broadcast %1 : vector<1x32xf32> to vector<16x32xf32>
    %17 = arith.mulf %16, %15 : vector<16x32xf32>
    %18 = math.sqrt %13 : vector<16x1xf32>
    %cst_8 = arith.constant 9.99999997E-7 : f32
    %19 = vector.broadcast %cst_8 : f32 to vector<16x1xf32>
    %20 = arith.addf %18, %19 : vector<16x1xf32>
    %21 = vector.broadcast %20 : vector<16x1xf32> to vector<16x32xf32>
    %22 = arith.divf %17, %21 : vector<16x32xf32>
    %23 = vector.broadcast %2 : vector<1x32xf32> to vector<16x32xf32>
    %24 = arith.addf %22, %23 : vector<16x32xf32>
    %25 = arith.truncf %24 : vector<16x32xf32> to vector<16x32xbf16>
    %c0_9 = arith.constant 0 : index
    %c0_10 = arith.constant 0 : index
    %26 = vector.load %arg4[%c0_9, %c0_10] : memref<32x64xbf16, #tpu.memory_space<vmem>>, vector<32x64xbf16>
    %cst_11 = arith.constant dense<0.000000e+00> : vector<16x64xf32>
    %27 = tpu.matmul %25, %26, %cst_11 {dimension_numbers = #tpu.dot_dimension_numbers<[1], [0], [0], [1], [0, 0, 1, 1], [], []>} : vector<16x32xbf16>, vector<32x64xbf16>, vector<16x64xf32> -> vector<16x64xf32>
    %c0_12 = arith.constant 0 : index
    %c0_13 = arith.constant 0 : index
    %28 = vector.load %arg5[%c0_12, %c0_13] : memref<1x64xf32, #tpu.memory_space<vmem>>, vector<1x64xf32>
    %29 = vector.broadcast %28 : vector<1x64xf32> to vector<16x64xf32>
    %30 = arith.addf %27, %29 : vector<16x64xf32>
    %cst_14 = arith.constant 0.000000e+00 : f32
    %31 = vector.broadcast %cst_14 : f32 to vector<16x64xf32>
    %32 = arith.maximumf %30, %31 : vector<16x64xf32>
    %33 = arith.truncf %32 : vector<16x64xf32> to vector<16x64xbf16>
    %c0_15 = arith.constant 0 : index
    %c0_16 = arith.constant 0 : index
    %34 = vector.load %arg6[%c0_15, %c0_16] : memref<64x32xbf16, #tpu.memory_space<vmem>>, vector<64x32xbf16>
    %cst_17 = arith.constant dense<0.000000e+00> : vector<16x32xf32>
    %35 = tpu.matmul %33, %34, %cst_17 {dimension_numbers = #tpu.dot_dimension_numbers<[1], [0], [0], [1], [0, 0, 1, 1], [], []>} : vector<16x64xbf16>, vector<64x32xbf16>, vector<16x32xf32> -> vector<16x32xf32>
    %c0_18 = arith.constant 0 : index
    %c0_19 = arith.constant 0 : index
    %36 = vector.load %arg7[%c0_18, %c0_19] : memref<1x32xf32, #tpu.memory_space<vmem>>, vector<1x32xf32>
    %37 = vector.broadcast %36 : vector<1x32xf32> to vector<16x32xf32>
    %38 = arith.addf %35, %37 : vector<16x32xf32>
    %39 = arith.addf %0, %38 : vector<16x32xf32>
    %c0_20 = arith.constant 0 : index
    %c0_21 = arith.constant 0 : index
    %40 = vector.load %arg8[%c0_20, %c0_21] : memref<16x32xf32, #tpu.memory_space<vmem>>, vector<16x32xf32>
    tpu.vector_store %arg8[%c0_20, %c0_21], %39 {strides = array<i32>} : memref<16x32xf32, #tpu.memory_space<vmem>>, vector<16x32xf32>,
    return
  }
  func.func @transform_0(%arg0: i32) -> (i32, i32) {
    %c0_i32 = arith.constant 0 : i32
    %c0_i32_0 = arith.constant 0 : i32
    return %arg0, %c0_i32 : i32, i32
  }
  func.func @transform_1(%arg0: i32) -> (i32, i32) {
    %c0_i32 = arith.constant 0 : i32
    %c0_i32_0 = arith.constant 0 : i32
    %c0_i32_1 = arith.constant 0 : i32
    return %c0_i32, %c0_i32_0 : i32, i32
  }
  func.func @transform_2(%arg0: i32) -> (i32, i32) {
    %c0_i32 = arith.constant 0 : i32
    %c0_i32_0 = arith.constant 0 : i32
    %c0_i32_1 = arith.constant 0 : i32
    return %c0_i32, %c0_i32_0 : i32, i32
  }
  func.func @transform_3(%arg0: i32) -> (i32, i32) {
    %c0_i32 = arith.constant 0 : i32
    %c0_i32_0 = arith.constant 0 : i32
    %c0_i32_1 = arith.constant 0 : i32
    return %c0_i32, %c0_i32_0 : i32, i32
  }
  func.func @transform_4(%arg0: i32) -> (i32, i32) {
    %c0_i32 = arith.constant 0 : i32
    %c0_i32_0 = arith.constant 0 : i32
    %c0_i32_1 = arith.constant 0 : i32
    return %c0_i32, %c0_i32_0 : i32, i32
  }
  func.func @transform_5(%arg0: i32) -> (i32, i32) {
    %c0_i32 = arith.constant 0 : i32
    %c0_i32_0 = arith.constant 0 : i32
    %c0_i32_1 = arith.constant 0 : i32
    return %c0_i32, %c0_i32_0 : i32, i32
  }
  func.func @transform_6(%arg0: i32) -> (i32, i32) {
    %c0_i32 = arith.constant 0 : i32
    %c0_i32_0 = arith.constant 0 : i32
    %c0_i32_1 = arith.constant 0 : i32
    return %c0_i32, %c0_i32_0 : i32, i32
  }
  func.func @transform_7(%arg0: i32) -> (i32, i32) {
    %c0_i32 = arith.constant 0 : i32
    %c0_i32_0 = arith.constant 0 : i32
    return %arg0, %c0_i32 : i32, i32
  }
}

</mosaic_0001>

<llo_original>
// kernel: encoder_layer_forward.4
$region0: #{encoder_layer_forward.4}
  #allocation0 [shape = 'u32[]', space=smem, size = 0x4, offset = 0x4, fixed_abs, tag = 'smem constant byte address 0x4 - core index']
  #allocation1 [shape = 'u32[72,128]{1,0:T(1,128)}', space=vmem, size = 0x9000, scoped, tag = 'internal scratch']
  %s0 = inlined_call_operand.vmem [shape: f32[16,32], index: 0, kind: input, shape index: {}]
  %s1 = inlined_call_operand.hbm [shape: f32[1,32], index: 1, kind: input, shape index: {}]
  %s2 = inlined_call_operand.hbm [shape: f32[1,32], index: 2, kind: input, shape index: {}]
  %s3 = inlined_call_operand.hbm [shape: bf16[32,96], index: 3, kind: input, shape index: {}]
  %s4 = inlined_call_operand.hbm [shape: f32[1,96], index: 4, kind: input, shape index: {}]
  %s5 = inlined_call_operand.vmem [shape: bf16[16,96], index: 5, kind: output, shape index: {}]
  %s6 = sld [smem:[#allocation0]]
  $region46: #{encoder_layer_forward.4} parent=0
    _
  %s8 = ssub.s32 1, %s6
  %s9 = scalar_select 0, %s8, %s6
  $region1: #{encoder_layer_forward.4} parent=0
    #allocation2 [shape = 'u8[512]{0}', space=vmem, size = 0x400, scoped, tag = 'input window, operand 1, single buffered']
    #allocation3 [shape = 's32[1]{0}', space=sflag, size = 0x4, scoped, tag = 'scoped memory for encoder_layer_forward.4']
    #allocation4 [shape = 'u8[512]{0}', space=vmem, size = 0x400, scoped, tag = 'input window, operand 2, single buffered']
    #allocation5 [shape = 's32[1]{0}', space=sflag, size = 0x4, scoped, tag = 'scoped memory for encoder_layer_forward.4']
    #allocation6 [shape = 'u8[8192]{0}', space=vmem, size = 0x2000, scoped, tag = 'input window, operand 3, single buffered']
    #allocation7 [shape = 'u8[512]{0}', space=vmem, size = 0x400, scoped, tag = 'input window, operand 4, single buffered']
    #allocation8 [shape = 's32[1]{0}', space=sflag, size = 0x4, scoped, tag = 'scoped memory for encoder_layer_forward.4']
    %10 = vsyncpa [#allocation3], 0
    %11 = vsyncpa [#allocation5], 0
    %12 = vsyncpa [#allocation8], 0
    // Predicated region
    $region2: #{encoder_layer_forward.4} parent=1 // pred_check
      _
    $region3: #{encoder_layer_forward.4} parent=1 // pred_check_branch
      %14 = sbr.rel (0) target = $region5
    $region4: #{encoder_layer_forward.4} parent=1 // pred_region
      _
    $region5: #{encoder_layer_forward.4} parent=1 // pred_fallthru
      _
    // Predicated region
    $region6: #{encoder_layer_forward.4} parent=1 // pred_check
      _
    $region7: #{encoder_layer_forward.4} parent=1 // pred_check_branch
      %16 = sbr.rel (0) target = $region9
    $region8: #{encoder_layer_forward.4} parent=1 // pred_region
      %18 = vsyncadd [#allocation3], 0
      %s20 = sshll.u32 %s1, 4
      %s21 = int_to_ptr.hbm [resolvable:$true] %s20
      %s22 = sshll.u32 [#allocation2], 4
      %s23 = int_to_ptr.vmem [resolvable:$true] %s22
      %25 = dma.hbm_to_vmem [thread:$0]  %s21, 16, %s23, [#allocation3]
    $region9: #{encoder_layer_forward.4} parent=1 // pred_fallthru
      _
    // Predicated region
    $region10: #{encoder_layer_forward.4} parent=1 // pred_check
      _
    $region11: #{encoder_layer_forward.4} parent=1 // pred_check_branch
      %27 = sbr.rel (0) target = $region13
    $region12: #{encoder_layer_forward.4} parent=1 // pred_region
      %29 = vsyncadd [#allocation5], 0
      %s31 = sshll.u32 %s2, 4
      %s32 = int_to_ptr.hbm [resolvable:$true] %s31
      %s33 = sshll.u32 [#allocation4], 4
      %s34 = int_to_ptr.vmem [resolvable:$true] %s33
      %36 = dma.hbm_to_vmem [thread:$0]  %s32, 16, %s34, [#allocation5]
    $region13: #{encoder_layer_forward.4} parent=1 // pred_fallthru
      _
    // Predicated region
    $region14: #{encoder_layer_forward.4} parent=1 // pred_check
      _
    $region15: #{encoder_layer_forward.4} parent=1 // pred_check_branch
      %38 = sbr.rel (0) target = $region17
    $region16: #{encoder_layer_forward.4} parent=1 // pred_region
      %40 = vsyncadd [#allocation5], 0
      %s41 = sshll.u32 %s3, 4
      %s42 = int_to_ptr.hbm [resolvable:$true] %s41
      %s43 = sshll.u32 [#allocation6], 4
      %s44 = int_to_ptr.vmem [resolvable:$true] %s43
      %49 = dma.hbm_to_vmem [thread:$0]  %s42, 256, %s44, [#allocation5], 64, 64, 4
    $region17: #{encoder_layer_forward.4} parent=1 // pred_fallthru
      _
    // Predicated region
    $region18: #{encoder_layer_forward.4} parent=1 // pred_check
      _
    $region19: #{encoder_layer_forward.4} parent=1 // pred_check_branch
      %51 = sbr.rel (0) target = $region21
    $region20: #{encoder_layer_forward.4} parent=1 // pred_region
      %53 = vsyncadd [#allocation8], 0
      %s55 = sshll.u32 %s4, 4
      %s56 = int_to_ptr.hbm [resolvable:$true] %s55
      %s57 = sshll.u32 [#allocation7], 4
      %s58 = int_to_ptr.vmem [resolvable:$true] %s57
      %60 = dma.hbm_to_vmem [thread:$0]  %s56, 16, %s58, [#allocation8]
    $region21: #{encoder_layer_forward.4} parent=1 // pred_fallthru
      _
    // Predicated region
    $region22: #{encoder_layer_forward.4} parent=1 // pred_check
      _
    $region23: #{encoder_layer_forward.4} parent=1 // pred_check_branch
      %62 = sbr.rel (0) target = $region25
    $region24: #{encoder_layer_forward.4} parent=1 // pred_region
      %64 = dma.done [#allocation3], 16
    $region25: #{encoder_layer_forward.4} parent=1 // pred_fallthru
      _
    // Predicated region
    $region26: #{encoder_layer_forward.4} parent=1 // pred_check
      _
    $region27: #{encoder_layer_forward.4} parent=1 // pred_check_branch
      %66 = sbr.rel (0) target = $region29
    $region28: #{encoder_layer_forward.4} parent=1 // pred_region
      %68 = dma.done [#allocation5], 16
    $region29: #{encoder_layer_forward.4} parent=1 // pred_fallthru
      _
    // Predicated region
    $region30: #{encoder_layer_forward.4} parent=1 // pred_check
      _
    $region31: #{encoder_layer_forward.4} parent=1 // pred_check_branch
      %70 = sbr.rel (0) target = $region33
    $region32: #{encoder_layer_forward.4} parent=1 // pred_region
      %72 = dma.done [#allocation5], 256
    $region33: #{encoder_layer_forward.4} parent=1 // pred_fallthru
      _
    // Predicated region
    $region34: #{encoder_layer_forward.4} parent=1 // pred_check
      _
    $region35: #{encoder_layer_forward.4} parent=1 // pred_check_branch
      %74 = sbr.rel (0) target = $region37
    $region36: #{encoder_layer_forward.4} parent=1 // pred_region
      %76 = dma.done [#allocation8], 16
    $region37: #{encoder_layer_forward.4} parent=1 // pred_fallthru
      _
    %v78 = vld [vmem:[%s0] sm:$0xff]
    %v79 = vld [vmem:[%s0 + $0x8] sm:$0xff]
    %v80 = vld [vmem:[#allocation2] sm:$0x1]
    %v81 = vld [vmem:[#allocation4] sm:$0x1]
    %vm82 = vcmask 261120
    %v83 = vsel %vm82, %v78, 0.0
    %84 = vadd.xlane.f32.xlu0 %v83
    %v85 = vpop.xlane.xlu0 %84
    %v86 = vsel %vm82, %v79, 0.0
    %87 = vadd.xlane.f32.xlu0 %v86
    %v88 = vpop.xlane.xlu0 %87
    %v89 = vrcp.pop 32.0
    %v90 = vmul.f32 32.0, %v89
    %v91 = vsub.f32 1.0, %v90
    %v92 = vmul.f32 %v89, %v91
    %v93 = vadd.f32 %v89, %v92
    %vm94 = vweird.f32 %v89
    %v95 = vsel %vm94, %v89, %v93
    %v96 = vmul.f32 %v85, %v95
    %v97 = vmul.f32 %v88, %v95
    %v98 = vsub.f32 %v78, %v96
    %v99 = vsub.f32 %v79, %v97
    %v100 = vmul.f32 %v98, %v98
    %v101 = vmul.f32 %v99, %v99
    %v102 = vsel %vm82, %v100, 0.0
    %103 = vadd.xlane.f32.xlu0 %v102
    %v104 = vpop.xlane.xlu0 %103
    %v105 = vsel %vm82, %v101, 0.0
    %106 = vadd.xlane.f32.xlu0 %v105
    %v107 = vpop.xlane.xlu0 %106
    %v108 = vrcp.pop 31.0
    %v109 = vmul.f32 31.0, %v108
    %v110 = vsub.f32 1.0, %v109
    %v111 = vmul.f32 %v108, %v110
    %v112 = vadd.f32 %v108, %v111
    %vm113 = vweird.f32 %v108
    %v114 = vsel %vm113, %v108, %v112
    %v115 = vmul.f32 %v104, %v114
    %v116 = vmul.f32 %v107, %v114
    %v118 = vperm.slane %v80, 0
    %v120 = vmul.f32 %v118, %v98
    %v121 = vmul.f32 %v118, %v99
    %v122 = vrsqrt.pop %v115
    %v123 = vmul.f32 %v122, %v115
    %v124 = vmul.f32 %v123, %v122
    %v125 = vmul.f32 0.5, %v124
    %v126 = vsub.f32 1.5, %v125
    %v127 = vmul.f32 %v122, %v126
    %v128 = vmul.f32 %v115, %v127
    %vm129 = vcmp.eq.f32.partialorder %v115, inf
    %v130 = vsel %vm129, %v115, %v128
    %vm131 = vcmp.eq.f32.partialorder %v115, 0.0
    %v132 = vand.u32 %v115, 2147483648
    %v133 = vsel %vm131, %v132, %v130
    %v134 = vrsqrt.pop %v116
    %v135 = vmul.f32 %v134, %v116
    %v136 = vmul.f32 %v135, %v134
    %v137 = vmul.f32 0.5, %v136
    %v138 = vsub.f32 1.5, %v137
    %v139 = vmul.f32 %v134, %v138
    %v140 = vmul.f32 %v116, %v139
    %vm141 = vcmp.eq.f32.partialorder %v116, inf
    %v142 = vsel %vm141, %v116, %v140
    %vm143 = vcmp.eq.f32.partialorder %v116, 0.0
    %v144 = vand.u32 %v116, 2147483648
    %v145 = vsel %vm143, %v144, %v142
    %v146 = vadd.f32 %v133, 1e-06
    %v147 = vadd.f32 %v145, 1e-06
    %v148 = vrcp.pop %v146
    %v149 = vmul.f32 %v146, %v148
    %v150 = vsub.f32 1.0, %v149
    %v151 = vmul.f32 %v148, %v150
    %v152 = vadd.f32 %v148, %v151
    %vm153 = vweird.f32 %v146
    %vm154 = vweird.f32 %v148
    %vm155 = vmor %vm153, %vm154
    %v156 = vsel %vm155, %v148, %v152
    %v157 = vand.u32 2147483647, %v146
    %vm158 = vcmp.eq.f32.partialorder %v157, 8.507059e+37
    %v159 = vand.u32 %v146, 2147483648
    %v160 = vor.u32 1.1754944e-38, %v159
    %v161 = vsel %vm158, %v160, %v156
    %v162 = vmul.f32 %v120, %v161
    %v163 = vrcp.pop %v147
    %v164 = vmul.f32 %v147, %v163
    %v165 = vsub.f32 1.0, %v164
    %v166 = vmul.f32 %v163, %v165
    %v167 = vadd.f32 %v163, %v166
    %vm168 = vweird.f32 %v147
    %vm169 = vweird.f32 %v163
    %vm170 = vmor %vm168, %vm169
    %v171 = vsel %vm170, %v163, %v167
    %v172 = vand.u32 2147483647, %v147
    %vm173 = vcmp.eq.f32.partialorder %v172, 8.507059e+37
    %v174 = vand.u32 %v147, 2147483648
    %v175 = vor.u32 1.1754944e-38, %v174
    %v176 = vsel %vm173, %v175, %v171
    %v177 = vmul.f32 %v121, %v176
    %v179 = vperm.slane %v81, 0
    %v181 = vadd.f32 %v162, %v179
    %v182 = vadd.f32 %v177, %v179
    %v183 = vpack.c.bf16 %v182, %v181
    %v184 = vld [vmem:[#allocation6] sm:$0xf]
    %v185 = vld [vmem:[#allocation6 + $0x4] sm:$0xf]
    %v186 = vld [vmem:[#allocation6 + $0x8] sm:$0xf]
    %v187 = vld [vmem:[#allocation6 + $0xc] sm:$0xf]
    %v188 = vld [vmem:[#allocation7] sm:$0x1]
    %v190 = vperm.slane %v188, 0
    %v196 = vunpack.c.l.b16 %v184
    %v197 = vunpack.c.l.b16 %v185
    %v198 = vunpack.c.l.b16 %v186
    %v199 = vunpack.c.l.b16 %v187
    %v200 = vpack.c.b16 %v197, %v196
    %v201 = vpack.c.b16 %v199, %v198
    %v205 = vsel %vm82, %v183, 0
    %207 = vmatpush.bf16.msra.mxu0 0
    %208 = vmatpush.bf16.msra.mxu0 0
    %209 = vmatpush.bf16.msra.mxu0 0
    %210 = vmatpush.bf16.msra.mxu0 0
    %211 = vmatpush.bf16.msra.mxu0 0
    %212 = vmatpush.bf16.msra.mxu0 0
    %213 = vmatpush.bf16.msra.mxu0 %v201
    %214 = vmatpush.bf16.msra.mxu0 %v200
    %215 = vmatmul.bf16.gmra.mxu0 %v205
    %v216 = vpop.f32.mrf.mxu0
    %v217 = vadd.f32 %v190, %v216
    %v218 = vpop.f32.mrf.mxu0
    %v219 = vadd.f32 %v190, %v218
    %220 = vdwg.mxu0
    %v221 = vpack.c.bf16 %v217, %v217
    %v222 = vpack.c.bf16 %v219, %v219
    %vm223 = vcmask 781312
    %224 = vst.msk [vmem:[%s5] sm:$0xf] %vm223, %v221
    %225 = vst.msk [vmem:[%s5 + $0x4] sm:$0xf] %vm223, %v222
    // Predicated region
    $region38: #{encoder_layer_forward.4} parent=1 // pred_check
      _
    $region39: #{encoder_layer_forward.4} parent=1 // pred_check_branch
      %227 = sbr.rel (0) target = $region41
    $region40: #{encoder_layer_forward.4} parent=1 // pred_region
      _
    $region41: #{encoder_layer_forward.4} parent=1 // pred_fallthru
      _
    // Predicated region
    $region42: #{encoder_layer_forward.4} parent=1 // pred_check
      _
    $region43: #{encoder_layer_forward.4} parent=1 // pred_check_branch
      %229 = sbr.rel (0) target = $region45
    $region44: #{encoder_layer_forward.4} parent=1 // pred_region
      _
    $region45: #{encoder_layer_forward.4} parent=1 // pred_fallthru
      _
    %230 = vsyncpa [#allocation3], 1
    %231 = vsyncpa [#allocation5], 1
    %232 = vsyncpa [#allocation8], 1

// kernel: encoder_layer_forward.6
$region0: #{encoder_layer_forward.6}
  #allocation0 [shape = 'u32[]', space=smem, size = 0x4, offset = 0x4, fixed_abs, tag = 'smem constant byte address 0x4 - core index']
  #allocation1 [shape = 'u32[72,128]{1,0:T(1,128)}', space=vmem, size = 0x9000, scoped, tag = 'internal scratch']
  %s0 = inlined_call_operand.vmem [shape: bf16[16,32], index: 0, kind: input, shape index: {}]
  %s1 = inlined_call_operand.vmem [shape: bf16[32,32], index: 1, kind: input, shape index: {}]
  %s2 = inlined_call_operand.vmem [shape: f32[1,32], index: 2, kind: input, shape index: {}]
  %s3 = inlined_call_operand.vmem [shape: f32[16,32], index: 3, kind: input, shape index: {}]
  %s4 = inlined_call_operand.vmem [shape: f32[16,32], index: 4, kind: output, shape index: {}]
  %s5 = sld [smem:[#allocation0]]
  $region26: #{encoder_layer_forward.6} parent=0
    _
  %s7 = ssub.s32 1, %s5
  %s8 = scalar_select 0, %s7, %s5
  // Predicated region
  $region2: #{encoder_layer_forward.6} parent=0 // pred_check
    _
  $region3: #{encoder_layer_forward.6} parent=0 // pred_check_branch
    %10 = sbr.rel (0) target = $region5
  $region4: #{encoder_layer_forward.6} parent=0 // pred_region
    _
  $region5: #{encoder_layer_forward.6} parent=0 // pred_fallthru
    _
  // Predicated region
  $region6: #{encoder_layer_forward.6} parent=0 // pred_check
    _
  $region7: #{encoder_layer_forward.6} parent=0 // pred_check_branch
    %12 = sbr.rel (0) target = $region9
  $region8: #{encoder_layer_forward.6} parent=0 // pred_region
    _
  $region9: #{encoder_layer_forward.6} parent=0 // pred_fallthru
    _
  // Predicated region
  $region10: #{encoder_layer_forward.6} parent=0 // pred_check
    _
  $region11: #{encoder_layer_forward.6} parent=0 // pred_check_branch
    %14 = sbr.rel (0) target = $region13
  $region12: #{encoder_layer_forward.6} parent=0 // pred_region
    _
  $region13: #{encoder_layer_forward.6} parent=0 // pred_fallthru
    _
  // Predicated region
  $region14: #{encoder_layer_forward.6} parent=0 // pred_check
    _
  $region15: #{encoder_layer_forward.6} parent=0 // pred_check_branch
    %16 = sbr.rel (0) target = $region17
  $region16: #{encoder_layer_forward.6} parent=0 // pred_region
    _
  $region17: #{encoder_layer_forward.6} parent=0 // pred_fallthru
    _
  %v18 = vld [vmem:[%s0] sm:$0xf]
  %v19 = vld [vmem:[%s0 + $0x4] sm:$0xf]
  %v20 = vld [vmem:[%s1] sm:$0xf]
  %v21 = vld [vmem:[%s1 + $0x4] sm:$0xf]
  %v22 = vld [vmem:[%s1 + $0x8] sm:$0xf]
  %v23 = vld [vmem:[%s1 + $0xc] sm:$0xf]
  %v26 = vunpack.c.l.b16 %v18
  %v27 = vunpack.c.l.b16 %v19
  %v28 = vpack.c.b16 %v27, %v26
  %v33 = vunpack.c.l.b16 %v20
  %v34 = vunpack.c.l.b16 %v21
  %v35 = vunpack.c.l.b16 %v22
  %v36 = vunpack.c.l.b16 %v23
  %v37 = vpack.c.b16 %v34, %v33
  %v38 = vpack.c.b16 %v36, %v35
  %vm41 = vcmask 261120
  %v43 = vsel %vm41, %v28, 0
  %45 = vmatpush.bf16.msra.mxu0 0
  %46 = vmatpush.bf16.msra.mxu0 0
  %47 = vmatpush.bf16.msra.mxu0 0
  %48 = vmatpush.bf16.msra.mxu0 0
  %49 = vmatpush.bf16.msra.mxu0 0
  %50 = vmatpush.bf16.msra.mxu0 0
  %51 = vmatpush.bf16.msra.mxu0 %v38
  %52 = vmatpush.bf16.msra.mxu0 %v37
  %53 = vmatmul.bf16.gmra.mxu0 %v43
  %v54 = vpop.f32.mrf.mxu0
  %v55 = vadd.f32 0.0, %v54
  %v56 = vpop.f32.mrf.mxu0
  %v57 = vadd.f32 0.0, %v56
  %58 = vdwg.mxu0
  %v59 = vld [vmem:[%s3] sm:$0xff]
  %v60 = vld [vmem:[%s3 + $0x8] sm:$0xff]
  %v61 = vadd.f32 %v59, %v55
  %v62 = vadd.f32 %v60, %v57
  %v63 = vld [vmem:[%s2] sm:$0x1]
  %v65 = vperm.slane %v63, 0
  %v67 = vadd.f32 %v61, %v65
  %v68 = vadd.f32 %v62, %v65
  %69 = vst.msk [vmem:[%s4] sm:$0xff] %vm41, %v67
  %70 = vst.msk [vmem:[%s4 + $0x8] sm:$0xff] %vm41, %v68
  // Predicated region
  $region18: #{encoder_layer_forward.6} parent=0 // pred_check
    _
  $region19: #{encoder_layer_forward.6} parent=0 // pred_check_branch
    %72 = sbr.rel (0) target = $region21
  $region20: #{encoder_layer_forward.6} parent=0 // pred_region
    _
  $region21: #{encoder_layer_forward.6} parent=0 // pred_fallthru
    _
  // Predicated region
  $region22: #{encoder_layer_forward.6} parent=0 // pred_check
    _
  $region23: #{encoder_layer_forward.6} parent=0 // pred_check_branch
    %74 = sbr.rel (0) target = $region25
  $region24: #{encoder_layer_forward.6} parent=0 // pred_region
    _
  $region25: #{encoder_layer_forward.6} parent=0 // pred_fallthru
    _

// kernel: encoder_layer_forward.7
$region0: #{encoder_layer_forward.7}
  #allocation0 [shape = 'u32[]', space=smem, size = 0x4, offset = 0x4, fixed_abs, tag = 'smem constant byte address 0x4 - core index']
  #allocation1 [shape = 'u32[72,128]{1,0:T(1,128)}', space=vmem, size = 0x9000, scoped, tag = 'internal scratch']
  %s0 = inlined_call_operand.vmem [shape: f32[16,32], index: 0, kind: input, shape index: {}]
  %s1 = inlined_call_operand.vmem [shape: f32[1,32], index: 1, kind: input, shape index: {}]
  %s2 = inlined_call_operand.vmem [shape: f32[1,32], index: 2, kind: input, shape index: {}]
  %s3 = inlined_call_operand.vmem [shape: bf16[32,64], index: 3, kind: input, shape index: {}]
  %s4 = inlined_call_operand.vmem [shape: f32[1,64], index: 4, kind: input, shape index: {}]
  %s5 = inlined_call_operand.vmem [shape: bf16[64,32], index: 5, kind: input, shape index: {}]
  %s6 = inlined_call_operand.vmem [shape: f32[1,32], index: 6, kind: input, shape index: {}]
  %s7 = inlined_call_operand.hbm [shape: f32[16,32], index: 7, kind: output, shape index: {}]
  %s8 = sld [smem:[#allocation0]]
  $region38: #{encoder_layer_forward.7} parent=0
    _
  %s10 = ssub.s32 1, %s8
  %s11 = scalar_select 0, %s10, %s8
  $region1: #{encoder_layer_forward.7} parent=0
    #allocation2 [shape = 'u8[8192]{0}', space=vmem, size = 0x2000, scoped, tag = 'output window, operand 0, single buffered']
    #allocation3 [shape = 's32[1]{0}', space=sflag, size = 0x4, scoped, tag = 'scoped memory for encoder_layer_forward.7']
    %12 = vsyncpa [#allocation3], 0
    // Predicated region
    $region2: #{encoder_layer_forward.7} parent=1 // pred_check
      _
    $region3: #{encoder_layer_forward.7} parent=1 // pred_check_branch
      %14 = sbr.rel (0) target = $region5
    $region4: #{encoder_layer_forward.7} parent=1 // pred_region
      _
    $region5: #{encoder_layer_forward.7} parent=1 // pred_fallthru
      _
    // Predicated region
    $region6: #{encoder_layer_forward.7} parent=1 // pred_check
      _
    $region7: #{encoder_layer_forward.7} parent=1 // pred_check_branch
      %16 = sbr.rel (0) target = $region9
    $region8: #{encoder_layer_forward.7} parent=1 // pred_region
      _
    $region9: #{encoder_layer_forward.7} parent=1 // pred_fallthru
      _
    // Predicated region
    $region10: #{encoder_layer_forward.7} parent=1 // pred_check
      _
    $region11: #{encoder_layer_forward.7} parent=1 // pred_check_branch
      %18 = sbr.rel (0) target = $region13
    $region12: #{encoder_layer_forward.7} parent=1 // pred_region
      _
    $region13: #{encoder_layer_forward.7} parent=1 // pred_fallthru
      _
    // Predicated region
    $region14: #{encoder_layer_forward.7} parent=1 // pred_check
      _
    $region15: #{encoder_layer_forward.7} parent=1 // pred_check_branch
      %20 = sbr.rel (0) target = $region17
    $region16: #{encoder_layer_forward.7} parent=1 // pred_region
      _
    $region17: #{encoder_layer_forward.7} parent=1 // pred_fallthru
      _
    // Predicated region
    $region18: #{encoder_layer_forward.7} parent=1 // pred_check
      _
    $region19: #{encoder_layer_forward.7} parent=1 // pred_check_branch
      %22 = sbr.rel (0) target = $region21
    $region20: #{encoder_layer_forward.7} parent=1 // pred_region
      _
    $region21: #{encoder_layer_forward.7} parent=1 // pred_fallthru
      _
    // Predicated region
    $region22: #{encoder_layer_forward.7} parent=1 // pred_check
      _
    $region23: #{encoder_layer_forward.7} parent=1 // pred_check_branch
      %24 = sbr.rel (0) target = $region25
    $region24: #{encoder_layer_forward.7} parent=1 // pred_region
      _
    $region25: #{encoder_layer_forward.7} parent=1 // pred_fallthru
      _
    // Predicated region
    $region26: #{encoder_layer_forward.7} parent=1 // pred_check
      _
    $region27: #{encoder_layer_forward.7} parent=1 // pred_check_branch
      %26 = sbr.rel (0) target = $region29
    $region28: #{encoder_layer_forward.7} parent=1 // pred_region
      _
    $region29: #{encoder_layer_forward.7} parent=1 // pred_fallthru
      _
    %v28 = vld [vmem:[%s0] sm:$0xff]
    %v29 = vld [vmem:[%s0 + $0x8] sm:$0xff]
    %v30 = vld [vmem:[%s1] sm:$0x1]
    %v31 = vld [vmem:[%s2] sm:$0x1]
    %vm32 = vcmask 261120
    %v33 = vsel %vm32, %v28, 0.0
    %34 = vadd.xlane.f32.xlu0 %v33
    %v35 = vpop.xlane.xlu0 %34
    %v36 = vsel %vm32, %v29, 0.0
    %37 = vadd.xlane.f32.xlu0 %v36
    %v38 = vpop.xlane.xlu0 %37
    %v39 = vrcp.pop 32.0
    %v40 = vmul.f32 32.0, %v39
    %v41 = vsub.f32 1.0, %v40
    %v42 = vmul.f32 %v39, %v41
    %v43 = vadd.f32 %v39, %v42
    %vm44 = vweird.f32 %v39
    %v45 = vsel %vm44, %v39, %v43
    %v46 = vmul.f32 %v35, %v45
    %v47 = vmul.f32 %v38, %v45
    %v48 = vsub.f32 %v28, %v46
    %v49 = vsub.f32 %v29, %v47
    %v50 = vmul.f32 %v48, %v48
    %v51 = vmul.f32 %v49, %v49
    %v52 = vsel %vm32, %v50, 0.0
    %53 = vadd.xlane.f32.xlu0 %v52
    %v54 = vpop.xlane.xlu0 %53
    %v55 = vsel %vm32, %v51, 0.0
    %56 = vadd.xlane.f32.xlu0 %v55
    %v57 = vpop.xlane.xlu0 %56
    %v58 = vrcp.pop 31.0
    %v59 = vmul.f32 31.0, %v58
    %v60 = vsub.f32 1.0, %v59
    %v61 = vmul.f32 %v58, %v60
    %v62 = vadd.f32 %v58, %v61
    %vm63 = vweird.f32 %v58
    %v64 = vsel %vm63, %v58, %v62
    %v65 = vmul.f32 %v54, %v64
    %v66 = vmul.f32 %v57, %v64
    %v68 = vperm.slane %v30, 0
    %v70 = vmul.f32 %v68, %v48
    %v71 = vmul.f32 %v68, %v49
    %v72 = vrsqrt.pop %v65
    %v73 = vmul.f32 %v72, %v65
    %v74 = vmul.f32 %v73, %v72
    %v75 = vmul.f32 0.5, %v74
    %v76 = vsub.f32 1.5, %v75
    %v77 = vmul.f32 %v72, %v76
    %v78 = vmul.f32 %v65, %v77
    %vm79 = vcmp.eq.f32.partialorder %v65, inf
    %v80 = vsel %vm79, %v65, %v78
    %vm81 = vcmp.eq.f32.partialorder %v65, 0.0
    %v82 = vand.u32 %v65, 2147483648
    %v83 = vsel %vm81, %v82, %v80
    %v84 = vrsqrt.pop %v66
    %v85 = vmul.f32 %v84, %v66
    %v86 = vmul.f32 %v85, %v84
    %v87 = vmul.f32 0.5, %v86
    %v88 = vsub.f32 1.5, %v87
    %v89 = vmul.f32 %v84, %v88
    %v90 = vmul.f32 %v66, %v89
    %vm91 = vcmp.eq.f32.partialorder %v66, inf
    %v92 = vsel %vm91, %v66, %v90
    %vm93 = vcmp.eq.f32.partialorder %v66, 0.0
    %v94 = vand.u32 %v66, 2147483648
    %v95 = vsel %vm93, %v94, %v92
    %v96 = vadd.f32 %v83, 1e-06
    %v97 = vadd.f32 %v95, 1e-06
    %v98 = vrcp.pop %v96
    %v99 = vmul.f32 %v96, %v98
    %v100 = vsub.f32 1.0, %v99
    %v101 = vmul.f32 %v98, %v100
    %v102 = vadd.f32 %v98, %v101
    %vm103 = vweird.f32 %v96
    %vm104 = vweird.f32 %v98
    %vm105 = vmor %vm103, %vm104
    %v106 = vsel %vm105, %v98, %v102
    %v107 = vand.u32 2147483647, %v96
    %vm108 = vcmp.eq.f32.partialorder %v107, 8.507059e+37
    %v109 = vand.u32 %v96, 2147483648
    %v110 = vor.u32 1.1754944e-38, %v109
    %v111 = vsel %vm108, %v110, %v106
    %v112 = vmul.f32 %v70, %v111
    %v113 = vrcp.pop %v97
    %v114 = vmul.f32 %v97, %v113
    %v115 = vsub.f32 1.0, %v114
    %v116 = vmul.f32 %v113, %v115
    %v117 = vadd.f32 %v113, %v116
    %vm118 = vweird.f32 %v97
    %vm119 = vweird.f32 %v113
    %vm120 = vmor %vm118, %vm119
    %v121 = vsel %vm120, %v113, %v117
    %v122 = vand.u32 2147483647, %v97
    %vm123 = vcmp.eq.f32.partialorder %v122, 8.507059e+37
    %v124 = vand.u32 %v97, 2147483648
    %v125 = vor.u32 1.1754944e-38, %v124
    %v126 = vsel %vm123, %v125, %v121
    %v127 = vmul.f32 %v71, %v126
    %v129 = vperm.slane %v31, 0
    %v131 = vadd.f32 %v112, %v129
    %v132 = vadd.f32 %v127, %v129
    %v133 = vpack.c.bf16 %v132, %v131
    %v134 = vld [vmem:[%s3] sm:$0xf]
    %v135 = vld [vmem:[%s3 + $0x4] sm:$0xf]
    %v136 = vld [vmem:[%s3 + $0x8] sm:$0xf]
    %v137 = vld [vmem:[%s3 + $0xc] sm:$0xf]
    %v138 = vld [vmem:[%s4] sm:$0x1]
    %v140 = vperm.slane %v138, 0
    %v146 = vunpack.c.l.b16 %v134
    %v147 = vunpack.c.l.b16 %v135
    %v148 = vunpack.c.l.b16 %v136
    %v149 = vunpack.c.l.b16 %v137
    %v150 = vpack.c.b16 %v147, %v146
    %v151 = vpack.c.b16 %v149, %v148
    %v155 = vsel %vm32, %v133, 0
    %157 = vmatpush.bf16.msra.mxu0 0
    %158 = vmatpush.bf16.msra.mxu0 0
    %159 = vmatpush.bf16.msra.mxu0 0
    %160 = vmatpush.bf16.msra.mxu0 0
    %161 = vmatpush.bf16.msra.mxu0 0
    %162 = vmatpush.bf16.msra.mxu0 0
    %163 = vmatpush.bf16.msra.mxu0 %v151
    %164 = vmatpush.bf16.msra.mxu0 %v150
    %165 = vmatmul.bf16.gmra.mxu0 %v155
    %v166 = vpop.f32.mrf.mxu0
    %v167 = vadd.f32 %v140, %v166
    %v168 = vpop.f32.mrf.mxu0
    %v169 = vadd.f32 %v140, %v168
    %170 = vdwg.mxu0
    %v171 = vmax.f32 %v167, 0.0
    %v172 = vmax.f32 %v169, 0.0
    %v173 = vpack.c.bf16 %v172, %v171
    %v174 = vld [vmem:[%s5] sm:$0xf]
    %v175 = vld [vmem:[%s5 + $0x4] sm:$0xf]
    %v176 = vld [vmem:[%s5 + $0x8] sm:$0xf]
    %v177 = vld [vmem:[%s5 + $0xc] sm:$0xf]
    %v178 = vld [vmem:[%s5 + $0x10] sm:$0xf]
    %v179 = vld [vmem:[%s5 + $0x14] sm:$0xf]
    %v180 = vld [vmem:[%s5 + $0x18] sm:$0xf]
    %v181 = vld [vmem:[%s5 + $0x1c] sm:$0xf]
    %v182 = vld [vmem:[%s6] sm:$0x1]
    %v184 = vperm.slane %v182, 0
    %v194 = vunpack.c.l.b16 %v174
    %v195 = vunpack.c.l.b16 %v175
    %v196 = vunpack.c.l.b16 %v176
    %v197 = vunpack.c.l.b16 %v177
    %v198 = vunpack.c.l.b16 %v178
    %v199 = vunpack.c.l.b16 %v179
    %v200 = vunpack.c.l.b16 %v180
    %v201 = vunpack.c.l.b16 %v181
    %v202 = vpack.c.b16 %v195, %v194
    %v203 = vpack.c.b16 %v197, %v196
    %v204 = vpack.c.b16 %v199, %v198
    %v205 = vpack.c.b16 %v201, %v200
    %vm210 = vcmask 523264
    %v212 = vsel %vm210, %v173, 0
    %214 = vmatpush.bf16.msra.mxu0 0
    %215 = vmatpush.bf16.msra.mxu0 0
    %216 = vmatpush.bf16.msra.mxu0 0
    %217 = vmatpush.bf16.msra.mxu0 0
    %218 = vmatpush.bf16.msra.mxu0 %v205
    %219 = vmatpush.bf16.msra.mxu0 %v204
    %220 = vmatpush.bf16.msra.mxu0 %v203
    %221 = vmatpush.bf16.msra.mxu0 %v202
    %222 = vmatmul.bf16.gmra.mxu0 %v212
    %v223 = vpop.f32.mrf.mxu0
    %v224 = vadd.f32 %v184, %v223
    %v225 = vpop.f32.mrf.mxu0
    %v226 = vadd.f32 %v184, %v225
    %227 = vdwg.mxu0
    %v228 = vadd.f32 %v28, %v224
    %v229 = vadd.f32 %v29, %v226
    %230 = vst.msk [vmem:[#allocation2] sm:$0xff] %vm32, %v228
    %231 = vst.msk [vmem:[#allocation2 + $0x8] sm:$0xff] %vm32, %v229
    // Predicated region
    $region30: #{encoder_layer_forward.7} parent=1 // pred_check
      _
    $region31: #{encoder_layer_forward.7} parent=1 // pred_check_branch
      %233 = sbr.rel (0) target = $region33
    $region32: #{encoder_layer_forward.7} parent=1 // pred_region
      %235 = vsyncadd [#allocation3], 0
      %s236 = sshll.u32 [#allocation2], 4
      %s237 = int_to_ptr.vmem [resolvable:$true] %s236
      %s238 = sshll.u32 %s7, 4
      %s239 = int_to_ptr.hbm [resolvable:$true] %s238
      %244 = dma.vmem_to_hbm [thread:$0]  %s237, 256, %s239, [#allocation3], 128, 128, 8
    $region33: #{encoder_layer_forward.7} parent=1 // pred_fallthru
      _
    // Predicated region
    $region34: #{encoder_layer_forward.7} parent=1 // pred_check
      _
    $region35: #{encoder_layer_forward.7} parent=1 // pred_check_branch
      %246 = sbr.rel (0) target = $region37
    $region36: #{encoder_layer_forward.7} parent=1 // pred_region
      %248 = dma.done [#allocation3], 256
    $region37: #{encoder_layer_forward.7} parent=1 // pred_fallthru
      _
    %249 = vsyncpa [#allocation3], 1

// kernel: encoder_layer_forward.5
$region0: #{encoder_layer_forward.5}
  #allocation0 [shape = 'u32[]', space=smem, size = 0x4, offset = 0x4, fixed_abs, tag = 'smem constant byte address 0x4 - core index']
  #allocation1 [shape = 'u32[72,128]{1,0:T(1,128)}', space=vmem, size = 0x9000, scoped, tag = 'internal scratch']
  #allocation2 [shape = 'f32[8,8,1]{2,1,0:T(8,128)}', space=vmem, size = 0x8000, scoped, tag = 'scratch operand']
  #allocation3 [shape = 'f32[8,8,1]{2,1,0:T(8,128)}', space=vmem, size = 0x8000, scoped, tag = 'scratch operand']
  #allocation4 [shape = 'f32[8,8,8]{2,1,0:T(8,128)}', space=vmem, size = 0x8000, scoped, tag = 'scratch operand']
  %s0 = inlined_call_operand.vmem [shape: bf16[8,8,8], index: 0, kind: input, shape index: {}]
  %s1 = inlined_call_operand.vmem [shape: bf16[8,8,8], index: 1, kind: input, shape index: {}]
  %s2 = inlined_call_operand.vmem [shape: bf16[8,8,8], index: 2, kind: input, shape index: {}]
  %s3 = inlined_call_operand.vmem [shape: f32[8,8], index: 3, kind: input, shape index: {}]
  %s4 = inlined_call_operand.vmem [shape: bf16[8,8,8], index: 4, kind: output, shape index: {}]
  %s5 = sld [smem:[#allocation0]]
  $region34: #{encoder_layer_forward.5} parent=0
    _
  %s7 = ssub.s32 1, %s5
  %s8 = scalar_select 0, %s7, %s5
  // Predicated region
  $region2: #{encoder_layer_forward.5} parent=0 // pred_check
    _
  $region3: #{encoder_layer_forward.5} parent=0 // pred_check_branch
    %10 = sbr.rel (0) target = $region5
  $region4: #{encoder_layer_forward.5} parent=0 // pred_region
    _
  $region5: #{encoder_layer_forward.5} parent=0 // pred_fallthru
    _
  // Predicated region
  $region6: #{encoder_layer_forward.5} parent=0 // pred_check
    _
  $region7: #{encoder_layer_forward.5} parent=0 // pred_check_branch
    %12 = sbr.rel (0) target = $region9
  $region8: #{encoder_layer_forward.5} parent=0 // pred_region
    _
  $region9: #{encoder_layer_forward.5} parent=0 // pred_fallthru
    _
  // Predicated region
  $region10: #{encoder_layer_forward.5} parent=0 // pred_check
    _
  $region11: #{encoder_layer_forward.5} parent=0 // pred_check_branch
    %14 = sbr.rel (0) target = $region13
  $region12: #{encoder_layer_forward.5} parent=0 // pred_region
    _
  $region13: #{encoder_layer_forward.5} parent=0 // pred_fallthru
    _
  // Predicated region
  $region14: #{encoder_layer_forward.5} parent=0 // pred_check
    _
  $region15: #{encoder_layer_forward.5} parent=0 // pred_check_branch
    %16 = sbr.rel (0) target = $region17
  $region16: #{encoder_layer_forward.5} parent=0 // pred_region
    _
  $region17: #{encoder_layer_forward.5} parent=0 // pred_fallthru
    _
  %p18 = scmp.eq.s32.totalorder 0, 0
  // Predicated region
  $region18: #{encoder_layer_forward.5} parent=0 // pred_check
    %p19 = pneg %p18
  $region19: #{encoder_layer_forward.5} parent=0 // pred_check_branch
    %21 = sbr.rel (%p19) target = $region21
  $region20: #{encoder_layer_forward.5} parent=0 // pred_region
    %vm22 = vcmask 7168
    %23 = vst.msk [vmem:[#allocation2] sm:$0xff] %vm22, -inf
    %24 = vst.msk [vmem:[#allocation2 + $0x8] sm:$0xff] %vm22, -inf
    %25 = vst.msk [vmem:[#allocation2 + $0x10] sm:$0xff] %vm22, -inf
    %26 = vst.msk [vmem:[#allocation2 + $0x18] sm:$0xff] %vm22, -inf
    %27 = vst.msk [vmem:[#allocation2 + $0x20] sm:$0xff] %vm22, -inf
    %28 = vst.msk [vmem:[#allocation2 + $0x28] sm:$0xff] %vm22, -inf
    %29 = vst.msk [vmem:[#allocation2 + $0x30] sm:$0xff] %vm22, -inf
    %30 = vst.msk [vmem:[#allocation2 + $0x38] sm:$0xff] %vm22, -inf
    %31 = vst.msk [vmem:[#allocation3] sm:$0xff] %vm22, 0.0
    %32 = vst.msk [vmem:[#allocation3 + $0x8] sm:$0xff] %vm22, 0.0
    %33 = vst.msk [vmem:[#allocation3 + $0x10] sm:$0xff] %vm22, 0.0
    %34 = vst.msk [vmem:[#allocation3 + $0x18] sm:$0xff] %vm22, 0.0
    %35 = vst.msk [vmem:[#allocation3 + $0x20] sm:$0xff] %vm22, 0.0
    %36 = vst.msk [vmem:[#allocation3 + $0x28] sm:$0xff] %vm22, 0.0
    %37 = vst.msk [vmem:[#allocation3 + $0x30] sm:$0xff] %vm22, 0.0
    %38 = vst.msk [vmem:[#allocation3 + $0x38] sm:$0xff] %vm22, 0.0
    %vm39 = vcmask 64512
    %40 = vst.msk [vmem:[#allocation4] sm:$0xff] %vm39, 0.0
    %41 = vst.msk [vmem:[#allocation4 + $0x8] sm:$0xff] %vm39, 0.0
    %42 = vst.msk [vmem:[#allocation4 + $0x10] sm:$0xff] %vm39, 0.0
    %43 = vst.msk [vmem:[#allocation4 + $0x18] sm:$0xff] %vm39, 0.0
    %44 = vst.msk [vmem:[#allocation4 + $0x20] sm:$0xff] %vm39, 0.0
    %45 = vst.msk [vmem:[#allocation4 + $0x28] sm:$0xff] %vm39, 0.0
    %46 = vst.msk [vmem:[#allocation4 + $0x30] sm:$0xff] %vm39, 0.0
    %47 = vst.msk [vmem:[#allocation4 + $0x38] sm:$0xff] %vm39, 0.0
  $region21: #{encoder_layer_forward.5} parent=0 // pred_fallthru
    _
  %v48 = vld [vmem:[%s0] sm:$0xf]
  %v49 = vld [vmem:[%s0 + $0x4] sm:$0xf]
  %v50 = vld [vmem:[%s0 + $0x8] sm:$0xf]
  %v51 = vld [vmem:[%s0 + $0xc] sm:$0xf]
  %v52 = vld [vmem:[%s0 + $0x10] sm:$0xf]
  %v53 = vld [vmem:[%s0 + $0x14] sm:$0xf]
  %v54 = vld [vmem:[%s0 + $0x18] sm:$0xf]
  %v55 = vld [vmem:[%s0 + $0x1c] sm:$0xf]
  %v56 = vld [vmem:[%s1] sm:$0xf]
  %v57 = vld [vmem:[%s1 + $0x4] sm:$0xf]
  %v58 = vld [vmem:[%s1 + $0x8] sm:$0xf]
  %v59 = vld [vmem:[%s1 + $0xc] sm:$0xf]
  %v60 = vld [vmem:[%s1 + $0x10] sm:$0xf]
  %v61 = vld [vmem:[%s1 + $0x14] sm:$0xf]
  %v62 = vld [vmem:[%s1 + $0x18] sm:$0xf]
  %v63 = vld [vmem:[%s1 + $0x1c] sm:$0xf]
  %vm64 = vcmask 64512
  %v66 = vsel %vm64, %v48, 0
  %v69 = vsel %vm64, %v56, 0
  %71 = vmatpush.bf16.xpose.msra.mxu0 0
  %72 = vmatpush.bf16.xpose.msra.mxu0 0
  %73 = vmatpush.bf16.xpose.msra.mxu0 0
  %74 = vmatpush.bf16.xpose.msra.mxu0 0
  %75 = vmatpush.bf16.xpose.msra.mxu0 0
  %76 = vmatpush.bf16.xpose.msra.mxu0 0
  %77 = vmatpush.bf16.xpose.msra.mxu0 0
  %78 = vmatpush.bf16.xpose.msra.mxu0 %v69
  %79 = vmatmul.bf16.gmra.mxu0 %v66
  %v80 = vpop.f32.mrf.mxu0
  %v81 = vadd.f32 0.0, %v80
  %v82 = vpop.f32.mrf.mxu0
  %83 = vdwg.mxu0
  %v85 = vsel %vm64, %v49, 0
  %v88 = vsel %vm64, %v57, 0
  %90 = vmatpush.bf16.xpose.msra.mxu0 0
  %91 = vmatpush.bf16.xpose.msra.mxu0 0
  %92 = vmatpush.bf16.xpose.msra.mxu0 0
  %93 = vmatpush.bf16.xpose.msra.mxu0 0
  %94 = vmatpush.bf16.xpose.msra.mxu0 0
  %95 = vmatpush.bf16.xpose.msra.mxu0 0
  %96 = vmatpush.bf16.xpose.msra.mxu0 0
  %97 = vmatpush.bf16.xpose.msra.mxu0 %v88
  %98 = vmatmul.bf16.gmra.mxu0 %v85
  %v99 = vpop.f32.mrf.mxu0
  %v100 = vadd.f32 0.0, %v99
  %v101 = vpop.f32.mrf.mxu0
  %102 = vdwg.mxu0
  %v104 = vsel %vm64, %v50, 0
  %v107 = vsel %vm64, %v58, 0
  %109 = vmatpush.bf16.xpose.msra.mxu0 0
  %110 = vmatpush.bf16.xpose.msra.mxu0 0
  %111 = vmatpush.bf16.xpose.msra.mxu0 0
  %112 = vmatpush.bf16.xpose.msra.mxu0 0
  %113 = vmatpush.bf16.xpose.msra.mxu0 0
  %114 = vmatpush.bf16.xpose.msra.mxu0 0
  %115 = vmatpush.bf16.xpose.msra.mxu0 0
  %116 = vmatpush.bf16.xpose.msra.mxu0 %v107
  %117 = vmatmul.bf16.gmra.mxu0 %v104
  %v118 = vpop.f32.mrf.mxu0
  %v119 = vadd.f32 0.0, %v118
  %v120 = vpop.f32.mrf.mxu0
  %121 = vdwg.mxu0
  %v123 = vsel %vm64, %v51, 0
  %v126 = vsel %vm64, %v59, 0
  %128 = vmatpush.bf16.xpose.msra.mxu0 0
  %129 = vmatpush.bf16.xpose.msra.mxu0 0
  %130 = vmatpush.bf16.xpose.msra.mxu0 0
  %131 = vmatpush.bf16.xpose.msra.mxu0 0
  %132 = vmatpush.bf16.xpose.msra.mxu0 0
  %133 = vmatpush.bf16.xpose.msra.mxu0 0
  %134 = vmatpush.bf16.xpose.msra.mxu0 0
  %135 = vmatpush.bf16.xpose.msra.mxu0 %v126
  %136 = vmatmul.bf16.gmra.mxu0 %v123
  %v137 = vpop.f32.mrf.mxu0
  %v138 = vadd.f32 0.0, %v137
  %v139 = vpop.f32.mrf.mxu0
  %140 = vdwg.mxu0
  %v142 = vsel %vm64, %v52, 0
  %v145 = vsel %vm64, %v60, 0
  %147 = vmatpush.bf16.xpose.msra.mxu0 0
  %148 = vmatpush.bf16.xpose.msra.mxu0 0
  %149 = vmatpush.bf16.xpose.msra.mxu0 0
  %150 = vmatpush.bf16.xpose.msra.mxu0 0
  %151 = vmatpush.bf16.xpose.msra.mxu0 0
  %152 = vmatpush.bf16.xpose.msra.mxu0 0
  %153 = vmatpush.bf16.xpose.msra.mxu0 0
  %154 = vmatpush.bf16.xpose.msra.mxu0 %v145
  %155 = vmatmul.bf16.gmra.mxu0 %v142
  %v156 = vpop.f32.mrf.mxu0
  %v157 = vadd.f32 0.0, %v156
  %v158 = vpop.f32.mrf.mxu0
  %159 = vdwg.mxu0
  %v161 = vsel %vm64, %v53, 0
  %v164 = vsel %vm64, %v61, 0
  %166 = vmatpush.bf16.xpose.msra.mxu0 0
  %167 = vmatpush.bf16.xpose.msra.mxu0 0
  %168 = vmatpush.bf16.xpose.msra.mxu0 0
  %169 = vmatpush.bf16.xpose.msra.mxu0 0
  %170 = vmatpush.bf16.xpose.msra.mxu0 0
  %171 = vmatpush.bf16.xpose.msra.mxu0 0
  %172 = vmatpush.bf16.xpose.msra.mxu0 0
  %173 = vmatpush.bf16.xpose.msra.mxu0 %v164
  %174 = vmatmul.bf16.gmra.mxu0 %v161
  %v175 = vpop.f32.mrf.mxu0
  %v176 = vadd.f32 0.0, %v175
  %v177 = vpop.f32.mrf.mxu0
  %178 = vdwg.mxu0
  %v180 = vsel %vm64, %v54, 0
  %v183 = vsel %vm64, %v62, 0
  %185 = vmatpush.bf16.xpose.msra.mxu0 0
  %186 = vmatpush.bf16.xpose.msra.mxu0 0
  %187 = vmatpush.bf16.xpose.msra.mxu0 0
  %188 = vmatpush.bf16.xpose.msra.mxu0 0
  %189 = vmatpush.bf16.xpose.msra.mxu0 0
  %190 = vmatpush.bf16.xpose.msra.mxu0 0
  %191 = vmatpush.bf16.xpose.msra.mxu0 0
  %192 = vmatpush.bf16.xpose.msra.mxu0 %v183
  %193 = vmatmul.bf16.gmra.mxu0 %v180
  %v194 = vpop.f32.mrf.mxu0
  %v195 = vadd.f32 0.0, %v194
  %v196 = vpop.f32.mrf.mxu0
  %197 = vdwg.mxu0
  %v199 = vsel %vm64, %v55, 0
  %v202 = vsel %vm64, %v63, 0
  %204 = vmatpush.bf16.xpose.msra.mxu0 0
  %205 = vmatpush.bf16.xpose.msra.mxu0 0
  %206 = vmatpush.bf16.xpose.msra.mxu0 0
  %207 = vmatpush.bf16.xpose.msra.mxu0 0
  %208 = vmatpush.bf16.xpose.msra.mxu0 0
  %209 = vmatpush.bf16.xpose.msra.mxu0 0
  %210 = vmatpush.bf16.xpose.msra.mxu0 0
  %211 = vmatpush.bf16.xpose.msra.mxu0 %v202
  %212 = vmatmul.bf16.gmra.mxu0 %v199
  %v213 = vpop.f32.mrf.mxu0
  %v214 = vadd.f32 0.0, %v213
  %v215 = vpop.f32.mrf.mxu0
  %216 = vdwg.mxu0
  %v217 = vmul.f32 %v81, 0.35355338
  %v218 = vmul.f32 %v100, 0.35355338
  %v219 = vmul.f32 %v119, 0.35355338
  %v220 = vmul.f32 %v138, 0.35355338
  %v221 = vmul.f32 %v157, 0.35355338
  %v222 = vmul.f32 %v176, 0.35355338
  %v223 = vmul.f32 %v195, 0.35355338
  %v224 = vmul.f32 %v214, 0.35355338
  %v225 = vld [vmem:[%s3] sm:$0xff]
  %v227 = vrot.slane %v225, 1
  %v228 = vrot.slane %v225, 2
  %v229 = vrot.slane %v225, 3
  %v230 = vrot.slane %v225, 4
  %v231 = vrot.slane %v225, 5
  %v232 = vrot.slane %v225, 6
  %v233 = vrot.slane %v225, 7
  %vm241 = vcmp.eq.f32.partialorder %v225, 0.0
  %vm242 = vcmp.eq.f32.partialorder %v227, 0.0
  %vm243 = vcmp.eq.f32.partialorder %v228, 0.0
  %vm244 = vcmp.eq.f32.partialorder %v229, 0.0
  %vm245 = vcmp.eq.f32.partialorder %v230, 0.0
  %vm246 = vcmp.eq.f32.partialorder %v231, 0.0
  %vm247 = vcmp.eq.f32.partialorder %v232, 0.0
  %vm248 = vcmp.eq.f32.partialorder %v233, 0.0
  %v249 = vsel %vm241, 1, 0
  %v250 = vsel %vm242, 1, 0
  %v251 = vsel %vm243, 1, 0
  %v252 = vsel %vm244, 1, 0
  %v253 = vsel %vm245, 1, 0
  %v254 = vsel %vm246, 1, 0
  %v255 = vsel %vm247, 1, 0
  %v256 = vsel %vm248, 1, 0
  %v257 = vperm.slane %v249, 0
  %v258 = vperm.slane %v250, 0
  %v259 = vperm.slane %v251, 0
  %v260 = vperm.slane %v252, 0
  %v261 = vperm.slane %v253, 0
  %v262 = vperm.slane %v254, 0
  %v263 = vperm.slane %v255, 0
  %v264 = vperm.slane %v256, 0
  %vm265 = vcmp.eq.s32.totalorder %v257, 1
  %vm266 = vcmp.eq.s32.totalorder %v258, 1
  %vm267 = vcmp.eq.s32.totalorder %v259, 1
  %vm268 = vcmp.eq.s32.totalorder %v260, 1
  %vm269 = vcmp.eq.s32.totalorder %v261, 1
  %vm270 = vcmp.eq.s32.totalorder %v262, 1
  %vm271 = vcmp.eq.s32.totalorder %v263, 1
  %vm272 = vcmp.eq.s32.totalorder %v264, 1
  %v273 = vsel %vm265, -1e+09, %v217
  %v274 = vsel %vm266, -1e+09, %v218
  %v275 = vsel %vm267, -1e+09, %v219
  %v276 = vsel %vm268, -1e+09, %v220
  %v277 = vsel %vm269, -1e+09, %v221
  %v278 = vsel %vm270, -1e+09, %v222
  %v279 = vsel %vm271, -1e+09, %v223
  %v280 = vsel %vm272, -1e+09, %v224
  %v281 = vld [vmem:[#allocation2] sm:$0xff]
  %v282 = vld [vmem:[#allocation2 + $0x8] sm:$0xff]
  %v283 = vld [vmem:[#allocation2 + $0x10] sm:$0xff]
  %v284 = vld [vmem:[#allocation2 + $0x18] sm:$0xff]
  %v285 = vld [vmem:[#allocation2 + $0x20] sm:$0xff]
  %v286 = vld [vmem:[#allocation2 + $0x28] sm:$0xff]
  %v287 = vld [vmem:[#allocation2 + $0x30] sm:$0xff]
  %v288 = vld [vmem:[#allocation2 + $0x38] sm:$0xff]
  %v289 = vsel %vm64, %v273, -inf
  %290 = vmax.xlane.f32.xlu0 %v289
  %v291 = vpop.xlane.xlu0 %290
  %v292 = vsel %vm64, %v274, -inf
  %293 = vmax.xlane.f32.xlu0 %v292
  %v294 = vpop.xlane.xlu0 %293
  %v295 = vsel %vm64, %v275, -inf
  %296 = vmax.xlane.f32.xlu0 %v295
  %v297 = vpop.xlane.xlu0 %296
  %v298 = vsel %vm64, %v276, -inf
  %299 = vmax.xlane.f32.xlu0 %v298
  %v300 = vpop.xlane.xlu0 %299
  %v301 = vsel %vm64, %v277, -inf
  %302 = vmax.xlane.f32.xlu0 %v301
  %v303 = vpop.xlane.xlu0 %302
  %v304 = vsel %vm64, %v278, -inf
  %305 = vmax.xlane.f32.xlu0 %v304
  %v306 = vpop.xlane.xlu0 %305
  %v307 = vsel %vm64, %v279, -inf
  %308 = vmax.xlane.f32.xlu0 %v307
  %v309 = vpop.xlane.xlu0 %308
  %v310 = vsel %vm64, %v280, -inf
  %311 = vmax.xlane.f32.xlu0 %v310
  %v312 = vpop.xlane.xlu0 %311
  %v313 = vmax.f32 %v281, %v291
  %v314 = vmax.f32 %v282, %v294
  %v315 = vmax.f32 %v283, %v297
  %v316 = vmax.f32 %v284, %v300
  %v317 = vmax.f32 %v285, %v303
  %v318 = vmax.f32 %v286, %v306
  %v319 = vmax.f32 %v287, %v309
  %v320 = vmax.f32 %v288, %v312
  %v321 = vsub.f32 %v281, %v313
  %v322 = vsub.f32 %v282, %v314
  %v323 = vsub.f32 %v283, %v315
  %v324 = vsub.f32 %v284, %v316
  %v325 = vsub.f32 %v285, %v317
  %v326 = vsub.f32 %v286, %v318
  %v327 = vsub.f32 %v287, %v319
  %v328 = vsub.f32 %v288, %v320
  %v329 = vmul.f32 %v321, 1.442695
  %v330 = vpow.pop %v329
  %v331 = vmul.f32 %v322, 1.442695
  %v332 = vpow.pop %v331
  %v333 = vmul.f32 %v323, 1.442695
  %v334 = vpow.pop %v333
  %v335 = vmul.f32 %v324, 1.442695
  %v336 = vpow.pop %v335
  %v337 = vmul.f32 %v325, 1.442695
  %v338 = vpow.pop %v337
  %v339 = vmul.f32 %v326, 1.442695
  %v340 = vpow.pop %v339
  %v341 = vmul.f32 %v327, 1.442695
  %v342 = vpow.pop %v341
  %v343 = vmul.f32 %v328, 1.442695
  %v344 = vpow.pop %v343
  %346 = vset.pattern.permute.xlu0 0
  %347 = vperm.xlu0 %346, %v313
  %v348 = vpop.permute.xlu0 %347
  %351 = vset.pattern.permute.xlu0 0
  %352 = vperm.xlu0 %351, %v314
  %v353 = vpop.permute.xlu0 %352
  %356 = vset.pattern.permute.xlu0 0
  %357 = vperm.xlu0 %356, %v315
  %v358 = vpop.permute.xlu0 %357
  %361 = vset.pattern.permute.xlu0 0
  %362 = vperm.xlu0 %361, %v316
  %v363 = vpop.permute.xlu0 %362
  %366 = vset.pattern.permute.xlu0 0
  %367 = vperm.xlu0 %366, %v317
  %v368 = vpop.permute.xlu0 %367
  %371 = vset.pattern.permute.xlu0 0
  %372 = vperm.xlu0 %371, %v318
  %v373 = vpop.permute.xlu0 %372
  %376 = vset.pattern.permute.xlu0 0
  %377 = vperm.xlu0 %376, %v319
  %v378 = vpop.permute.xlu0 %377
  %381 = vset.pattern.permute.xlu0 0
  %382 = vperm.xlu0 %381, %v320
  %v383 = vpop.permute.xlu0 %382
  %v385 = vsub.f32 %v273, %v348
  %v386 = vsub.f32 %v274, %v353
  %v387 = vsub.f32 %v275, %v358
  %v388 = vsub.f32 %v276, %v363
  %v389 = vsub.f32 %v277, %v368
  %v390 = vsub.f32 %v278, %v373
  %v391 = vsub.f32 %v279, %v378
  %v392 = vsub.f32 %v280, %v383
  %v393 = vmul.f32 %v385, 1.442695
  %v394 = vpow.pop %v393
  %v395 = vmul.f32 %v386, 1.442695
  %v396 = vpow.pop %v395
  %v397 = vmul.f32 %v387, 1.442695
  %v398 = vpow.pop %v397
  %v399 = vmul.f32 %v388, 1.442695
  %v400 = vpow.pop %v399
  %v401 = vmul.f32 %v389, 1.442695
  %v402 = vpow.pop %v401
  %v403 = vmul.f32 %v390, 1.442695
  %v404 = vpow.pop %v403
  %v405 = vmul.f32 %v391, 1.442695
  %v406 = vpow.pop %v405
  %v407 = vmul.f32 %v392, 1.442695
  %v408 = vpow.pop %v407
  %v409 = vld [vmem:[#allocation3] sm:$0xff]
  %v410 = vld [vmem:[#allocation3 + $0x8] sm:$0xff]
  %v411 = vld [vmem:[#allocation3 + $0x10] sm:$0xff]
  %v412 = vld [vmem:[#allocation3 + $0x18] sm:$0xff]
  %v413 = vld [vmem:[#allocation3 + $0x20] sm:$0xff]
  %v414 = vld [vmem:[#allocation3 + $0x28] sm:$0xff]
  %v415 = vld [vmem:[#allocation3 + $0x30] sm:$0xff]
  %v416 = vld [vmem:[#allocation3 + $0x38] sm:$0xff]
  %v417 = vmul.f32 %v330, %v409
  %v418 = vmul.f32 %v332, %v410
  %v419 = vmul.f32 %v334, %v411
  %v420 = vmul.f32 %v336, %v412
  %v421 = vmul.f32 %v338, %v413
  %v422 = vmul.f32 %v340, %v414
  %v423 = vmul.f32 %v342, %v415
  %v424 = vmul.f32 %v344, %v416
  %v425 = vsel %vm64, %v394, 0.0
  %426 = vadd.xlane.f32.xlu0 %v425
  %v427 = vpop.xlane.xlu0 %426
  %v428 = vsel %vm64, %v396, 0.0
  %429 = vadd.xlane.f32.xlu0 %v428
  %v430 = vpop.xlane.xlu0 %429
  %v431 = vsel %vm64, %v398, 0.0
  %432 = vadd.xlane.f32.xlu0 %v431
  %v433 = vpop.xlane.xlu0 %432
  %v434 = vsel %vm64, %v400, 0.0
  %435 = vadd.xlane.f32.xlu0 %v434
  %v436 = vpop.xlane.xlu0 %435
  %v437 = vsel %vm64, %v402, 0.0
  %438 = vadd.xlane.f32.xlu0 %v437
  %v439 = vpop.xlane.xlu0 %438
  %v440 = vsel %vm64, %v404, 0.0
  %441 = vadd.xlane.f32.xlu0 %v440
  %v442 = vpop.xlane.xlu0 %441
  %v443 = vsel %vm64, %v406, 0.0
  %444 = vadd.xlane.f32.xlu0 %v443
  %v445 = vpop.xlane.xlu0 %444
  %v446 = vsel %vm64, %v408, 0.0
  %447 = vadd.xlane.f32.xlu0 %v446
  %v448 = vpop.xlane.xlu0 %447
  %v449 = vadd.f32 %v417, %v427
  %v450 = vadd.f32 %v418, %v430
  %v451 = vadd.f32 %v419, %v433
  %v452 = vadd.f32 %v420, %v436
  %v453 = vadd.f32 %v421, %v439
  %v454 = vadd.f32 %v422, %v442
  %v455 = vadd.f32 %v423, %v445
  %v456 = vadd.f32 %v424, %v448
  %vm457 = vcmask 7168
  %458 = vst.msk [vmem:[#allocation3] sm:$0xff] %vm457, %v449
  %459 = vst.msk [vmem:[#allocation3 + $0x8] sm:$0xff] %vm457, %v450
  %460 = vst.msk [vmem:[#allocation3 + $0x10] sm:$0xff] %vm457, %v451
  %461 = vst.msk [vmem:[#allocation3 + $0x18] sm:$0xff] %vm457, %v452
  %462 = vst.msk [vmem:[#allocation3 + $0x20] sm:$0xff] %vm457, %v453
  %463 = vst.msk [vmem:[#allocation3 + $0x28] sm:$0xff] %vm457, %v454
  %464 = vst.msk [vmem:[#allocation3 + $0x30] sm:$0xff] %vm457, %v455
  %465 = vst.msk [vmem:[#allocation3 + $0x38] sm:$0xff] %vm457, %v456
  %v466 = vld [vmem:[#allocation4] sm:$0xff]
  %v467 = vld [vmem:[#allocation4 + $0x8] sm:$0xff]
  %v468 = vld [vmem:[#allocation4 + $0x10] sm:$0xff]
  %v469 = vld [vmem:[#allocation4 + $0x18] sm:$0xff]
  %v470 = vld [vmem:[#allocation4 + $0x20] sm:$0xff]
  %v471 = vld [vmem:[#allocation4 + $0x28] sm:$0xff]
  %v472 = vld [vmem:[#allocation4 + $0x30] sm:$0xff]
  %v473 = vld [vmem:[#allocation4 + $0x38] sm:$0xff]
  %475 = vset.pattern.permute.xlu0 0
  %476 = vperm.xlu0 %475, %v330
  %v477 = vpop.permute.xlu0 %476
  %480 = vset.pattern.permute.xlu0 0
  %481 = vperm.xlu0 %480, %v332
  %v482 = vpop.permute.xlu0 %481
  %485 = vset.pattern.permute.xlu0 0
  %486 = vperm.xlu0 %485, %v334
  %v487 = vpop.permute.xlu0 %486
  %490 = vset.pattern.permute.xlu0 0
  %491 = vperm.xlu0 %490, %v336
  %v492 = vpop.permute.xlu0 %491
  %495 = vset.pattern.permute.xlu0 0
  %496 = vperm.xlu0 %495, %v338
  %v497 = vpop.permute.xlu0 %496
  %500 = vset.pattern.permute.xlu0 0
  %501 = vperm.xlu0 %500, %v340
  %v502 = vpop.permute.xlu0 %501
  %505 = vset.pattern.permute.xlu0 0
  %506 = vperm.xlu0 %505, %v342
  %v507 = vpop.permute.xlu0 %506
  %510 = vset.pattern.permute.xlu0 0
  %511 = vperm.xlu0 %510, %v344
  %v512 = vpop.permute.xlu0 %511
  %v514 = vmul.f32 %v477, %v466
  %v515 = vmul.f32 %v482, %v467
  %v516 = vmul.f32 %v487, %v468
  %v517 = vmul.f32 %v492, %v469
  %v518 = vmul.f32 %v497, %v470
  %v519 = vmul.f32 %v502, %v471
  %v520 = vmul.f32 %v507, %v472
  %v521 = vmul.f32 %v512, %v473
  %v522 = vpack.c.bf16 %v394, %v394
  %v523 = vpack.c.bf16 %v396, %v396
  %v524 = vpack.c.bf16 %v398, %v398
  %v525 = vpack.c.bf16 %v400, %v400
  %v526 = vpack.c.bf16 %v402, %v402
  %v527 = vpack.c.bf16 %v404, %v404
  %v528 = vpack.c.bf16 %v406, %v406
  %v529 = vpack.c.bf16 %v408, %v408
  %v530 = vld [vmem:[%s2] sm:$0xf]
  %v531 = vld [vmem:[%s2 + $0x4] sm:$0xf]
  %v532 = vld [vmem:[%s2 + $0x8] sm:$0xf]
  %v533 = vld [vmem:[%s2 + $0xc] sm:$0xf]
  %v534 = vld [vmem:[%s2 + $0x10] sm:$0xf]
  %v535 = vld [vmem:[%s2 + $0x14] sm:$0xf]
  %v536 = vld [vmem:[%s2 + $0x18] sm:$0xf]
  %v537 = vld [vmem:[%s2 + $0x1c] sm:$0xf]
  %v539 = vsel %vm64, %v522, 0
  %vm541 = vcmask 1043456
  %v543 = vsel %vm541, %v530, 0
  %545 = vmatpush.bf16.msra.mxu0 0
  %546 = vmatpush.bf16.msra.mxu0 0
  %547 = vmatpush.bf16.msra.mxu0 0
  %548 = vmatpush.bf16.msra.mxu0 0
  %549 = vmatpush.bf16.msra.mxu0 0
  %550 = vmatpush.bf16.msra.mxu0 0
  %551 = vmatpush.bf16.msra.mxu0 0
  %552 = vmatpush.bf16.msra.mxu0 %v543
  %553 = vmatmul.bf16.gmra.mxu0 %v539
  %v554 = vpop.f32.mrf.mxu0
  %v555 = vadd.f32 0.0, %v554
  %v556 = vpop.f32.mrf.mxu0
  %557 = vdwg.mxu0
  %v559 = vsel %vm64, %v523, 0
  %v562 = vsel %vm541, %v531, 0
  %564 = vmatpush.bf16.msra.mxu0 0
  %565 = vmatpush.bf16.msra.mxu0 0
  %566 = vmatpush.bf16.msra.mxu0 0
  %567 = vmatpush.bf16.msra.mxu0 0
  %568 = vmatpush.bf16.msra.mxu0 0
  %569 = vmatpush.bf16.msra.mxu0 0
  %570 = vmatpush.bf16.msra.mxu0 0
  %571 = vmatpush.bf16.msra.mxu0 %v562
  %572 = vmatmul.bf16.gmra.mxu0 %v559
  %v573 = vpop.f32.mrf.mxu0
  %v574 = vadd.f32 0.0, %v573
  %v575 = vpop.f32.mrf.mxu0
  %576 = vdwg.mxu0
  %v578 = vsel %vm64, %v524, 0
  %v581 = vsel %vm541, %v532, 0
  %583 = vmatpush.bf16.msra.mxu0 0
  %584 = vmatpush.bf16.msra.mxu0 0
  %585 = vmatpush.bf16.msra.mxu0 0
  %586 = vmatpush.bf16.msra.mxu0 0
  %587 = vmatpush.bf16.msra.mxu0 0
  %588 = vmatpush.bf16.msra.mxu0 0
  %589 = vmatpush.bf16.msra.mxu0 0
  %590 = vmatpush.bf16.msra.mxu0 %v581
  %591 = vmatmul.bf16.gmra.mxu0 %v578
  %v592 = vpop.f32.mrf.mxu0
  %v593 = vadd.f32 0.0, %v592
  %v594 = vpop.f32.mrf.mxu0
  %595 = vdwg.mxu0
  %v597 = vsel %vm64, %v525, 0
  %v600 = vsel %vm541, %v533, 0
  %602 = vmatpush.bf16.msra.mxu0 0
  %603 = vmatpush.bf16.msra.mxu0 0
  %604 = vmatpush.bf16.msra.mxu0 0
  %605 = vmatpush.bf16.msra.mxu0 0
  %606 = vmatpush.bf16.msra.mxu0 0
  %607 = vmatpush.bf16.msra.mxu0 0
  %608 = vmatpush.bf16.msra.mxu0 0
  %609 = vmatpush.bf16.msra.mxu0 %v600
  %610 = vmatmul.bf16.gmra.mxu0 %v597
  %v611 = vpop.f32.mrf.mxu0
  %v612 = vadd.f32 0.0, %v611
  %v613 = vpop.f32.mrf.mxu0
  %614 = vdwg.mxu0
  %v616 = vsel %vm64, %v526, 0
  %v619 = vsel %vm541, %v534, 0
  %621 = vmatpush.bf16.msra.mxu0 0
  %622 = vmatpush.bf16.msra.mxu0 0
  %623 = vmatpush.bf16.msra.mxu0 0
  %624 = vmatpush.bf16.msra.mxu0 0
  %625 = vmatpush.bf16.msra.mxu0 0
  %626 = vmatpush.bf16.msra.mxu0 0
  %627 = vmatpush.bf16.msra.mxu0 0
  %628 = vmatpush.bf16.msra.mxu0 %v619
  %629 = vmatmul.bf16.gmra.mxu0 %v616
  %v630 = vpop.f32.mrf.mxu0
  %v631 = vadd.f32 0.0, %v630
  %v632 = vpop.f32.mrf.mxu0
  %633 = vdwg.mxu0
  %v635 = vsel %vm64, %v527, 0
  %v638 = vsel %vm541, %v535, 0
  %640 = vmatpush.bf16.msra.mxu0 0
  %641 = vmatpush.bf16.msra.mxu0 0
  %642 = vmatpush.bf16.msra.mxu0 0
  %643 = vmatpush.bf16.msra.mxu0 0
  %644 = vmatpush.bf16.msra.mxu0 0
  %645 = vmatpush.bf16.msra.mxu0 0
  %646 = vmatpush.bf16.msra.mxu0 0
  %647 = vmatpush.bf16.msra.mxu0 %v638
  %648 = vmatmul.bf16.gmra.mxu0 %v635
  %v649 = vpop.f32.mrf.mxu0
  %v650 = vadd.f32 0.0, %v649
  %v651 = vpop.f32.mrf.mxu0
  %652 = vdwg.mxu0
  %v654 = vsel %vm64, %v528, 0
  %v657 = vsel %vm541, %v536, 0
  %659 = vmatpush.bf16.msra.mxu0 0
  %660 = vmatpush.bf16.msra.mxu0 0
  %661 = vmatpush.bf16.msra.mxu0 0
  %662 = vmatpush.bf16.msra.mxu0 0
  %663 = vmatpush.bf16.msra.mxu0 0
  %664 = vmatpush.bf16.msra.mxu0 0
  %665 = vmatpush.bf16.msra.mxu0 0
  %666 = vmatpush.bf16.msra.mxu0 %v657
  %667 = vmatmul.bf16.gmra.mxu0 %v654
  %v668 = vpop.f32.mrf.mxu0
  %v669 = vadd.f32 0.0, %v668
  %v670 = vpop.f32.mrf.mxu0
  %671 = vdwg.mxu0
  %v673 = vsel %vm64, %v529, 0
  %v676 = vsel %vm541, %v537, 0
  %678 = vmatpush.bf16.msra.mxu0 0
  %679 = vmatpush.bf16.msra.mxu0 0
  %680 = vmatpush.bf16.msra.mxu0 0
  %681 = vmatpush.bf16.msra.mxu0 0
  %682 = vmatpush.bf16.msra.mxu0 0
  %683 = vmatpush.bf16.msra.mxu0 0
  %684 = vmatpush.bf16.msra.mxu0 0
  %685 = vmatpush.bf16.msra.mxu0 %v676
  %686 = vmatmul.bf16.gmra.mxu0 %v673
  %v687 = vpop.f32.mrf.mxu0
  %v688 = vadd.f32 0.0, %v687
  %v689 = vpop.f32.mrf.mxu0
  %690 = vdwg.mxu0
  %v691 = vadd.f32 %v514, %v555
  %v692 = vadd.f32 %v515, %v574
  %v693 = vadd.f32 %v516, %v593
  %v694 = vadd.f32 %v517, %v612
  %v695 = vadd.f32 %v518, %v631
  %v696 = vadd.f32 %v519, %v650
  %v697 = vadd.f32 %v520, %v669
  %v698 = vadd.f32 %v521, %v688
  %699 = vst.msk [vmem:[#allocation4] sm:$0xff] %vm64, %v691
  %700 = vst.msk [vmem:[#allocation4 + $0x8] sm:$0xff] %vm64, %v692
  %701 = vst.msk [vmem:[#allocation4 + $0x10] sm:$0xff] %vm64, %v693
  %702 = vst.msk [vmem:[#allocation4 + $0x18] sm:$0xff] %vm64, %v694
  %703 = vst.msk [vmem:[#allocation4 + $0x20] sm:$0xff] %vm64, %v695
  %704 = vst.msk [vmem:[#allocation4 + $0x28] sm:$0xff] %vm64, %v696
  %705 = vst.msk [vmem:[#allocation4 + $0x30] sm:$0xff] %vm64, %v697
  %706 = vst.msk [vmem:[#allocation4 + $0x38] sm:$0xff] %vm64, %v698
  %707 = vst.msk [vmem:[#allocation2] sm:$0xff] %vm457, %v313
  %708 = vst.msk [vmem:[#allocation2 + $0x8] sm:$0xff] %vm457, %v314
  %709 = vst.msk [vmem:[#allocation2 + $0x10] sm:$0xff] %vm457, %v315
  %710 = vst.msk [vmem:[#allocation2 + $0x18] sm:$0xff] %vm457, %v316
  %711 = vst.msk [vmem:[#allocation2 + $0x20] sm:$0xff] %vm457, %v317
  %712 = vst.msk [vmem:[#allocation2 + $0x28] sm:$0xff] %vm457, %v318
  %713 = vst.msk [vmem:[#allocation2 + $0x30] sm:$0xff] %vm457, %v319
  %714 = vst.msk [vmem:[#allocation2 + $0x38] sm:$0xff] %vm457, %v320
  // Predicated region
  $region22: #{encoder_layer_forward.5} parent=0 // pred_check
    %p715 = pneg %p18
  $region23: #{encoder_layer_forward.5} parent=0 // pred_check_branch
    %717 = sbr.rel (%p715) target = $region25
  $region24: #{encoder_layer_forward.5} parent=0 // pred_region
    %v718 = vld [vmem:[#allocation4] sm:$0xff]
    %v719 = vld [vmem:[#allocation4 + $0x8] sm:$0xff]
    %v720 = vld [vmem:[#allocation4 + $0x10] sm:$0xff]
    %v721 = vld [vmem:[#allocation4 + $0x18] sm:$0xff]
    %v722 = vld [vmem:[#allocation4 + $0x20] sm:$0xff]
    %v723 = vld [vmem:[#allocation4 + $0x28] sm:$0xff]
    %v724 = vld [vmem:[#allocation4 + $0x30] sm:$0xff]
    %v725 = vld [vmem:[#allocation4 + $0x38] sm:$0xff]
    %v726 = vld [vmem:[#allocation3] sm:$0xff]
    %v727 = vld [vmem:[#allocation3 + $0x8] sm:$0xff]
    %v728 = vld [vmem:[#allocation3 + $0x10] sm:$0xff]
    %v729 = vld [vmem:[#allocation3 + $0x18] sm:$0xff]
    %v730 = vld [vmem:[#allocation3 + $0x20] sm:$0xff]
    %v731 = vld [vmem:[#allocation3 + $0x28] sm:$0xff]
    %v732 = vld [vmem:[#allocation3 + $0x30] sm:$0xff]
    %v733 = vld [vmem:[#allocation3 + $0x38] sm:$0xff]
    %v734 = vrcp.pop %v726
    %v735 = vrcp.pop %v727
    %v736 = vrcp.pop %v728
    %v737 = vrcp.pop %v729
    %v738 = vrcp.pop %v730
    %v739 = vrcp.pop %v731
    %v740 = vrcp.pop %v732
    %v741 = vrcp.pop %v733
    %743 = vset.pattern.permute.xlu0 0
    %744 = vperm.xlu0 %743, %v734
    %v745 = vpop.permute.xlu0 %744
    %748 = vset.pattern.permute.xlu0 0
    %749 = vperm.xlu0 %748, %v735
    %v750 = vpop.permute.xlu0 %749
    %753 = vset.pattern.permute.xlu0 0
    %754 = vperm.xlu0 %753, %v736
    %v755 = vpop.permute.xlu0 %754
    %758 = vset.pattern.permute.xlu0 0
    %759 = vperm.xlu0 %758, %v737
    %v760 = vpop.permute.xlu0 %759
    %763 = vset.pattern.permute.xlu0 0
    %764 = vperm.xlu0 %763, %v738
    %v765 = vpop.permute.xlu0 %764
    %768 = vset.pattern.permute.xlu0 0
    %769 = vperm.xlu0 %768, %v739
    %v770 = vpop.permute.xlu0 %769
    %773 = vset.pattern.permute.xlu0 0
    %774 = vperm.xlu0 %773, %v740
    %v775 = vpop.permute.xlu0 %774
    %778 = vset.pattern.permute.xlu0 0
    %779 = vperm.xlu0 %778, %v741
    %v780 = vpop.permute.xlu0 %779
    %v782 = vmul.f32 %v718, %v745
    %v783 = vmul.f32 %v719, %v750
    %v784 = vmul.f32 %v720, %v755
    %v785 = vmul.f32 %v721, %v760
    %v786 = vmul.f32 %v722, %v765
    %v787 = vmul.f32 %v723, %v770
    %v788 = vmul.f32 %v724, %v775
    %v789 = vmul.f32 %v725, %v780
    %v790 = vpack.c.bf16 %v782, %v782
    %v791 = vpack.c.bf16 %v783, %v783
    %v792 = vpack.c.bf16 %v784, %v784
    %v793 = vpack.c.bf16 %v785, %v785
    %v794 = vpack.c.bf16 %v786, %v786
    %v795 = vpack.c.bf16 %v787, %v787
    %v796 = vpack.c.bf16 %v788, %v788
    %v797 = vpack.c.bf16 %v789, %v789
    %vm798 = vcmask 60416
    %799 = vst.msk [vmem:[%s4] sm:$0xf] %vm798, %v790
    %800 = vst.msk [vmem:[%s4 + $0x4] sm:$0xf] %vm798, %v791
    %801 = vst.msk [vmem:[%s4 + $0x8] sm:$0xf] %vm798, %v792
    %802 = vst.msk [vmem:[%s4 + $0xc] sm:$0xf] %vm798, %v793
    %803 = vst.msk [vmem:[%s4 + $0x10] sm:$0xf] %vm798, %v794
    %804 = vst.msk [vmem:[%s4 + $0x14] sm:$0xf] %vm798, %v795
    %805 = vst.msk [vmem:[%s4 + $0x18] sm:$0xf] %vm798, %v796
    %806 = vst.msk [vmem:[%s4 + $0x1c] sm:$0xf] %vm798, %v797
  $region25: #{encoder_layer_forward.5} parent=0 // pred_fallthru
    _
  // Predicated region
  $region26: #{encoder_layer_forward.5} parent=0 // pred_check
    _
  $region27: #{encoder_layer_forward.5} parent=0 // pred_check_branch
    %808 = sbr.rel (0) target = $region29
  $region28: #{encoder_layer_forward.5} parent=0 // pred_region
    _
  $region29: #{encoder_layer_forward.5} parent=0 // pred_fallthru
    _
  // Predicated region
  $region30: #{encoder_layer_forward.5} parent=0 // pred_check
    _
  $region31: #{encoder_layer_forward.5} parent=0 // pred_check_branch
    %810 = sbr.rel (0) target = $region33
  $region32: #{encoder_layer_forward.5} parent=0 // pred_region
    _
  $region33: #{encoder_layer_forward.5} parent=0 // pred_fallthru
    _

</llo_original>
